<compile_context>
chip_gen: v7x
topology: tpu7x:2x2x1
jax: 0.10.0
libtpu: 0.0.40
codegen_flags: <defaults>
</compile_context>

<pallas_src>
import math
import jax
import jax.numpy as jnp
from jax.experimental import pallas as pl
from jax.experimental.pallas import tpu as pltpu

# ---- small, module-consistent shapes ----
B, S, H = 2, 8, 32          # batch, seq, hidden_size
BS = B * S
NUM_HEADS = 4
HEAD_DIM = H // NUM_HEADS
FF = 4 * H                  # intermediate_fc_size = hidden_size * 4
EPS = 1e-6                  # matches nn.LayerNorm(..., eps=1e-06)
SCALE = 1.0 / math.sqrt(HEAD_DIM)
INV_H = 1.0 / H


def _layernorm(x, gamma, beta):
    # Two-pass mean/variance (matches torch.nn.LayerNorm, avoids cancellation).
    mu = jnp.sum(x, axis=-1, keepdims=True) * INV_H
    xc = x - mu
    var = jnp.sum(xc * xc, axis=-1, keepdims=True) * INV_H
    return xc * jax.lax.rsqrt(var + EPS) * gamma + beta


def _gelu_exact(x):
    # F.gelu default: exact erf-based gelu
    return 0.5 * x * (1.0 + jax.lax.erf(x * 0.7071067811865476))


def bert_layer_kernel(x_ref,
                      ln1_g_ref, ln1_b_ref,
                      wqkv_ref, bqkv_ref,
                      wo_ref, bo_ref,
                      ln2_g_ref, ln2_b_ref,
                      w1_ref, b1_ref, w2_ref, b2_ref,
                      out_ref,
                      ctx_ref):
    x = x_ref[...]                                   # (BS, H) — batch folded into rows

    # ---- norm1 ----
    xn1 = _layernorm(x, ln1_g_ref[...], ln1_b_ref[...])

    # ---- fused QKV projection: single (BS,H)@(H,3H) matmul (scale pre-folded) ----
    qkv = jnp.dot(xn1, wqkv_ref[...],
                  preferred_element_type=jnp.float32) + bqkv_ref[...]   # (BS, 3H)
    q = qkv[:, 0 * H:1 * H]
    k = qkv[:, 1 * H:2 * H]
    v = qkv[:, 2 * H:3 * H]

    # ---- rearrange heads to a leading batch axis: (NUM_HEADS*B, S, dH) ----
    # (static lane slices + leading-axis concat; batch index n = h*B + b)
    def to_heads(t):
        return jnp.concatenate(
            [t[:, h * HEAD_DIM:(h + 1) * HEAD_DIM].reshape(B, S, HEAD_DIM)
             for h in range(NUM_HEADS)], axis=0)

    qh = to_heads(q)
    kh = to_heads(k)
    vh = to_heads(v)

    # ---- ONE batched score matmul + ONE softmax over all (batch, head) pairs ----
    scores = jnp.einsum('nqd,nkd->nqk', qh, kh,
                        preferred_element_type=jnp.float32)             # (NH*B, S, S)
    m = jnp.max(scores, axis=-1, keepdims=True)
    e = jnp.exp(scores - m)
    p = e / jnp.sum(e, axis=-1, keepdims=True)       # exact reciprocal (tolerance-safe)
    ctx = jnp.einsum('nqk,nkd->nqd', p, vh,
                     preferred_element_type=jnp.float32)                # (NH*B, S, dH)

    # ---- reassemble heads onto the lane axis via VMEM scratch (no sublane concat) ----
    for h in range(NUM_HEADS):                        # static unroll, 4 lane-slice stores
        ctx_ref[:, h * HEAD_DIM:(h + 1) * HEAD_DIM] = \
            ctx[h * B:(h + 1) * B].reshape(BS, HEAD_DIM)

    # ---- single output projection over all rows/heads + residual 1 ----
    attn_out = jnp.dot(ctx_ref[...], wo_ref[...],
                       preferred_element_type=jnp.float32) + bo_ref[...]
    h1 = attn_out + x

    # ---- norm2 + feed forward (fc1 -> gelu -> fc2) over all B*S rows ----
    xn2 = _layernorm(h1, ln2_g_ref[...], ln2_b_ref[...])
    inter = jnp.dot(xn2, w1_ref[...], preferred_element_type=jnp.float32) + b1_ref[...]
    inter = _gelu_exact(inter)
    ff_out = jnp.dot(inter, w2_ref[...], preferred_element_type=jnp.float32) + b2_ref[...]

    # ---- residual 2 (dropout = identity at eval) ----
    out_ref[...] = (ff_out + h1).astype(out_ref.dtype)


def bert_layer(x, prepped_params):
    (ln1_g, ln1_b, wqkv, bqkv, wo, bo,
     ln2_g, ln2_b, w1, b1, w2, b2) = prepped_params

    # Fold batch into rows in the wrapper (contiguous reshape = layout plumbing only),
    # run a single program over the whole problem — no grid, no per-batch steps.
    flat = x.reshape(BS, H)
    vmem_spec = pl.BlockSpec(memory_space=pltpu.MemorySpace.VMEM)   # whole-array VMEM block
    out = pl.pallas_call(
        bert_layer_kernel,
        out_shape=jax.ShapeDtypeStruct((BS, H), x.dtype),
        in_specs=[vmem_spec] * 13,
        out_specs=vmem_spec,
        scratch_shapes=[pltpu.VMEM((BS, H), jnp.float32)],          # head-context assembly
    )(flat, ln1_g, ln1_b, wqkv, bqkv, wo, bo, ln2_g, ln2_b, w1, b1, w2, b2)
    return out.reshape(B, S, H)


def prepare_params(params):
    """One-time parameter prep: fuse QKV and fold 1/sqrt(head_dim) into q weights."""
    (ln1_g, ln1_b, wq, bq, wk, bk, wv, bv, wo, bo,
     ln2_g, ln2_b, w1, b1, w2, b2) = params
    wqkv = jnp.concatenate([wq * SCALE, wk, wv], axis=1)   # (H, 3H)
    bqkv = jnp.concatenate([bq * SCALE, bk, bv], axis=1)   # (1, 3H)
    return (ln1_g, ln1_b, wqkv, bqkv, wo, bo, ln2_g, ln2_b, w1, b1, w2, b2)


# ---------------- pure-JAX reference (for a sanity check) ----------------
def bert_layer_ref(x, params):
    (ln1_g, ln1_b, wq, bq, wk, bk, wv, bv, wo, bo,
     ln2_g, ln2_b, w1, b1, w2, b2) = params

    def ln(t, g, b):
        mu = jnp.mean(t, axis=-1, keepdims=True)
        var = jnp.mean((t - mu) ** 2, axis=-1, keepdims=True)
        return (t - mu) * jax.lax.rsqrt(var + EPS) * g + b

    xn1 = ln(x, ln1_g, ln1_b)
    q = xn1 @ wq + bq
    k = xn1 @ wk + bk
    v = xn1 @ wv + bv
    q = q.reshape(B, S, NUM_HEADS, HEAD_DIM).transpose(0, 2, 1, 3)
    k = k.reshape(B, S, NUM_HEADS, HEAD_DIM).transpose(0, 2, 1, 3)
    v = v.reshape(B, S, NUM_HEADS, HEAD_DIM).transpose(0, 2, 1, 3)
    scores = jnp.einsum("bhqd,bhkd->bhqk", q, k) * SCALE
    p = jax.nn.softmax(scores, axis=-1)
    ctx = jnp.einsum("bhqk,bhkd->bhqd", p, v).transpose(0, 2, 1, 3).reshape(B, S, H)
    attn_out = ctx @ wo + bo
    h1 = attn_out + x
    xn2 = ln(h1, ln2_g, ln2_b)
    inter = jax.nn.gelu(xn2 @ w1 + b1, approximate=False)
    ff = inter @ w2 + b2
    return ff + h1


def make_params(key):
    ks = jax.random.split(key, 8)
    std = 0.02
    p = (
        jnp.ones((1, H), jnp.float32),                           # ln1 gamma
        jnp.zeros((1, H), jnp.float32),                          # ln1 beta
        jax.random.normal(ks[0], (H, H), jnp.float32) * std,     # wq
        jnp.zeros((1, H), jnp.float32),                          # bq
        jax.random.normal(ks[1], (H, H), jnp.float32) * std,     # wk
        jnp.zeros((1, H), jnp.float32),                          # bk
        jax.random.normal(ks[2], (H, H), jnp.float32) * std,     # wv
        jnp.zeros((1, H), jnp.float32),                          # bv
        jax.random.normal(ks[3], (H, H), jnp.float32) * std,     # wo
        jnp.zeros((1, H), jnp.float32),                          # bo
        jnp.ones((1, H), jnp.float32),                           # ln2 gamma
        jnp.zeros((1, H), jnp.float32),                          # ln2 beta
        jax.random.normal(ks[4], (H, FF), jnp.float32) * std,    # fc1 w
        jnp.zeros((1, FF), jnp.float32),                         # fc1 b
        jax.random.normal(ks[5], (FF, H), jnp.float32) * std,    # fc2 w
        jnp.zeros((1, H), jnp.float32),                          # fc2 b
    )
    return p


if __name__ == "__main__":
    key = jax.random.PRNGKey(0)
    k_x, k_p = jax.random.split(key)
    x = jax.random.normal(k_x, (B, S, H), jnp.float32)
    params = make_params(k_p)
    prepped = prepare_params(params)      # one-time fusion / scale fold (not per call)

    out = bert_layer(x, prepped)
    out = jax.block_until_ready(out)

    ref = jax.block_until_ready(bert_layer_ref(x, params))
    assert out.shape == (B, S, H)
    assert jnp.allclose(out, ref, rtol=1e-4, atol=1e-4), "mismatch vs reference"

    print("KERNEL_OK")
</pallas_src>

<mosaic_0001>
module attributes {stable_mosaic.version = 11 : i64} {
  func.func @bert_layer_kernel(%arg0: memref<16x32xf32, #tpu.memory_space<vmem>>, %arg1: memref<1x32xf32, #tpu.memory_space<vmem>>, %arg2: memref<1x32xf32, #tpu.memory_space<vmem>>, %arg3: memref<32x96xf32, #tpu.memory_space<vmem>>, %arg4: memref<1x96xf32, #tpu.memory_space<vmem>>, %arg5: memref<32x32xf32, #tpu.memory_space<vmem>>, %arg6: memref<1x32xf32, #tpu.memory_space<vmem>>, %arg7: memref<1x32xf32, #tpu.memory_space<vmem>>, %arg8: memref<1x32xf32, #tpu.memory_space<vmem>>, %arg9: memref<32x128xf32, #tpu.memory_space<vmem>>, %arg10: memref<1x128xf32, #tpu.memory_space<vmem>>, %arg11: memref<128x32xf32, #tpu.memory_space<vmem>>, %arg12: memref<1x32xf32, #tpu.memory_space<vmem>>, %arg13: memref<16x32xf32, #tpu.memory_space<vmem>>, %arg14: memref<16x32xf32, #tpu.memory_space<vmem>>) attributes {dimension_semantics = [], scalar_prefetch = 0 : i64, scratch_operands = 1 : i64, tpu.core_type = #tpu.core_type<tc>} {
    %c0 = arith.constant 0 : index
    %c0_0 = arith.constant 0 : index
    %0 = vector.load %arg0[%c0, %c0_0] : memref<16x32xf32, #tpu.memory_space<vmem>>, vector<16x32xf32>
    %c0_1 = arith.constant 0 : index
    %c0_2 = arith.constant 0 : index
    %1 = vector.load %arg1[%c0_1, %c0_2] : memref<1x32xf32, #tpu.memory_space<vmem>>, vector<1x32xf32>
    %c0_3 = arith.constant 0 : index
    %c0_4 = arith.constant 0 : index
    %2 = vector.load %arg2[%c0_3, %c0_4] : memref<1x32xf32, #tpu.memory_space<vmem>>, vector<1x32xf32>
    %cst = arith.constant dense<0.000000e+00> : vector<16xf32>
    %3 = vector.multi_reduction <add>, %0, %cst [1] : vector<16x32xf32> to vector<16xf32>
    %4 = vector.shape_cast %3 : vector<16xf32> to vector<16x1xf32>
    %cst_5 = arith.constant 3.125000e-02 : f32
    %5 = vector.broadcast %cst_5 : f32 to vector<16x1xf32>
    %6 = arith.mulf %4, %5 : vector<16x1xf32>
    %7 = vector.broadcast %6 : vector<16x1xf32> to vector<16x32xf32>
    %8 = arith.subf %0, %7 : vector<16x32xf32>
    %9 = arith.mulf %8, %8 : vector<16x32xf32>
    %cst_6 = arith.constant dense<0.000000e+00> : vector<16xf32>
    %10 = vector.multi_reduction <add>, %9, %cst_6 [1] : vector<16x32xf32> to vector<16xf32>
    %11 = vector.shape_cast %10 : vector<16xf32> to vector<16x1xf32>
    %cst_7 = arith.constant 3.125000e-02 : f32
    %12 = vector.broadcast %cst_7 : f32 to vector<16x1xf32>
    %13 = arith.mulf %11, %12 : vector<16x1xf32>
    %cst_8 = arith.constant 9.99999997E-7 : f32
    %14 = vector.broadcast %cst_8 : f32 to vector<16x1xf32>
    %15 = arith.addf %13, %14 : vector<16x1xf32>
    %16 = math.rsqrt %15 : vector<16x1xf32>
    %17 = vector.broadcast %16 : vector<16x1xf32> to vector<16x32xf32>
    %18 = arith.mulf %8, %17 : vector<16x32xf32>
    %19 = vector.broadcast %1 : vector<1x32xf32> to vector<16x32xf32>
    %20 = arith.mulf %18, %19 : vector<16x32xf32>
    %21 = vector.broadcast %2 : vector<1x32xf32> to vector<16x32xf32>
    %22 = arith.addf %20, %21 : vector<16x32xf32>
    %c0_9 = arith.constant 0 : index
    %c0_10 = arith.constant 0 : index
    %23 = vector.load %arg3[%c0_9, %c0_10] : memref<32x96xf32, #tpu.memory_space<vmem>>, vector<32x96xf32>
    %cst_11 = arith.constant dense<0.000000e+00> : vector<16x96xf32>
    %24 = tpu.matmul %22, %23, %cst_11 {dimension_numbers = #tpu.dot_dimension_numbers<[1], [0], [0], [1], [0, 0, 1, 1], [], []>} : vector<16x32xf32>, vector<32x96xf32>, vector<16x96xf32> -> vector<16x96xf32>
    %c0_12 = arith.constant 0 : index
    %c0_13 = arith.constant 0 : index
    %25 = vector.load %arg4[%c0_12, %c0_13] : memref<1x96xf32, #tpu.memory_space<vmem>>, vector<1x96xf32>
    %26 = vector.broadcast %25 : vector<1x96xf32> to vector<16x96xf32>
    %27 = arith.addf %24, %26 : vector<16x96xf32>
    %28 = vector.extract_strided_slice %27 {offsets = [0, 0], sizes = [16, 32], strides = [1, 1]} : vector<16x96xf32> to vector<16x32xf32>
    %29 = vector.extract_strided_slice %27 {offsets = [0, 32], sizes = [16, 32], strides = [1, 1]} : vector<16x96xf32> to vector<16x32xf32>
    %30 = vector.extract_strided_slice %27 {offsets = [0, 64], sizes = [16, 32], strides = [1, 1]} : vector<16x96xf32> to vector<16x32xf32>
    %31 = vector.extract_strided_slice %28 {offsets = [0, 0], sizes = [16, 8], strides = [1, 1]} : vector<16x32xf32> to vector<16x8xf32>
    %32 = vector.shape_cast %31 : vector<16x8xf32> to vector<2x8x8xf32>
    %33 = vector.extract_strided_slice %28 {offsets = [0, 8], sizes = [16, 8], strides = [1, 1]} : vector<16x32xf32> to vector<16x8xf32>
    %34 = vector.shape_cast %33 : vector<16x8xf32> to vector<2x8x8xf32>
    %35 = vector.extract_strided_slice %28 {offsets = [0, 16], sizes = [16, 8], strides = [1, 1]} : vector<16x32xf32> to vector<16x8xf32>
    %36 = vector.shape_cast %35 : vector<16x8xf32> to vector<2x8x8xf32>
    %37 = vector.extract_strided_slice %28 {offsets = [0, 24], sizes = [16, 8], strides = [1, 1]} : vector<16x32xf32> to vector<16x8xf32>
    %38 = vector.shape_cast %37 : vector<16x8xf32> to vector<2x8x8xf32>
    %39 = tpu.concatenate %32, %34, %36, %38 in 0 : vector<2x8x8xf32>, vector<2x8x8xf32>, vector<2x8x8xf32>, vector<2x8x8xf32> -> vector<8x8x8xf32>
    %40 = vector.extract_strided_slice %29 {offsets = [0, 0], sizes = [16, 8], strides = [1, 1]} : vector<16x32xf32> to vector<16x8xf32>
    %41 = vector.shape_cast %40 : vector<16x8xf32> to vector<2x8x8xf32>
    %42 = vector.extract_strided_slice %29 {offsets = [0, 8], sizes = [16, 8], strides = [1, 1]} : vector<16x32xf32> to vector<16x8xf32>
    %43 = vector.shape_cast %42 : vector<16x8xf32> to vector<2x8x8xf32>
    %44 = vector.extract_strided_slice %29 {offsets = [0, 16], sizes = [16, 8], strides = [1, 1]} : vector<16x32xf32> to vector<16x8xf32>
    %45 = vector.shape_cast %44 : vector<16x8xf32> to vector<2x8x8xf32>
    %46 = vector.extract_strided_slice %29 {offsets = [0, 24], sizes = [16, 8], strides = [1, 1]} : vector<16x32xf32> to vector<16x8xf32>
    %47 = vector.shape_cast %46 : vector<16x8xf32> to vector<2x8x8xf32>
    %48 = tpu.concatenate %41, %43, %45, %47 in 0 : vector<2x8x8xf32>, vector<2x8x8xf32>, vector<2x8x8xf32>, vector<2x8x8xf32> -> vector<8x8x8xf32>
    %49 = vector.extract_strided_slice %30 {offsets = [0, 0], sizes = [16, 8], strides = [1, 1]} : vector<16x32xf32> to vector<16x8xf32>
    %50 = vector.shape_cast %49 : vector<16x8xf32> to vector<2x8x8xf32>
    %51 = vector.extract_strided_slice %30 {offsets = [0, 8], sizes = [16, 8], strides = [1, 1]} : vector<16x32xf32> to vector<16x8xf32>
    %52 = vector.shape_cast %51 : vector<16x8xf32> to vector<2x8x8xf32>
    %53 = vector.extract_strided_slice %30 {offsets = [0, 16], sizes = [16, 8], strides = [1, 1]} : vector<16x32xf32> to vector<16x8xf32>
    %54 = vector.shape_cast %53 : vector<16x8xf32> to vector<2x8x8xf32>
    %55 = vector.extract_strided_slice %30 {offsets = [0, 24], sizes = [16, 8], strides = [1, 1]} : vector<16x32xf32> to vector<16x8xf32>
    %56 = vector.shape_cast %55 : vector<16x8xf32> to vector<2x8x8xf32>
    %57 = tpu.concatenate %50, %52, %54, %56 in 0 : vector<2x8x8xf32>, vector<2x8x8xf32>, vector<2x8x8xf32>, vector<2x8x8xf32> -> vector<8x8x8xf32>
    "tpu.trace_start"() <{level = 10 : i32, message = "nqd,nkd->nqk"}> : () -> ()
    %cst_14 = arith.constant dense<0.000000e+00> : vector<8x8x8xf32>
    %58 = tpu.matmul %39, %48, %cst_14 {dimension_numbers = #tpu.dot_dimension_numbers<[2], [2], [1], [1], [0, 0, 0, 1, 1, 1], [0], [0]>} : vector<8x8x8xf32>, vector<8x8x8xf32>, vector<8x8x8xf32> -> vector<8x8x8xf32>
    "tpu.trace_stop"() : () -> ()
    %cst_15 = arith.constant dense<0xFF800000> : vector<8x8xf32>
    %59 = vector.multi_reduction <maximumf>, %58, %cst_15 [2] : vector<8x8x8xf32> to vector<8x8xf32>
    %60 = vector.shape_cast %59 : vector<8x8xf32> to vector<8x8x1xf32>
    %61 = vector.broadcast %60 : vector<8x8x1xf32> to vector<8x8x8xf32>
    %62 = arith.subf %58, %61 : vector<8x8x8xf32>
    %63 = math.exp %62 : vector<8x8x8xf32>
    %cst_16 = arith.constant dense<0.000000e+00> : vector<8x8xf32>
    %64 = vector.multi_reduction <add>, %63, %cst_16 [2] : vector<8x8x8xf32> to vector<8x8xf32>
    %65 = vector.shape_cast %64 : vector<8x8xf32> to vector<8x8x1xf32>
    %66 = vector.broadcast %65 : vector<8x8x1xf32> to vector<8x8x8xf32>
    %67 = arith.divf %63, %66 : vector<8x8x8xf32>
    "tpu.trace_start"() <{level = 10 : i32, message = "nqk,nkd->nqd"}> : () -> ()
    %cst_17 = arith.constant dense<0.000000e+00> : vector<8x8x8xf32>
    %68 = tpu.matmul %67, %57, %cst_17 {dimension_numbers = #tpu.dot_dimension_numbers<[2], [1], [1], [2], [0, 0, 0, 1, 1, 2], [0], [0]>} : vector<8x8x8xf32>, vector<8x8x8xf32>, vector<8x8x8xf32> -> vector<8x8x8xf32>
    "tpu.trace_stop"() : () -> ()
    %69 = vector.extract_strided_slice %68 {offsets = [0, 0, 0], sizes = [2, 8, 8], strides = [1, 1, 1]} : vector<8x8x8xf32> to vector<2x8x8xf32>
    %70 = vector.shape_cast %69 : vector<2x8x8xf32> to vector<16x8xf32>
    %c0_18 = arith.constant 0 : index
    %c0_19 = arith.constant 0 : index
    %71 = vector.load %arg14[%c0_18, %c0_19] : memref<16x32xf32, #tpu.memory_space<vmem>>, vector<16x8xf32>
    tpu.vector_store %arg14[%c0_18, %c0_19], %70 {strides = array<i32>} : memref<16x32xf32, #tpu.memory_space<vmem>>, vector<16x8xf32>,
    %72 = vector.extract_strided_slice %68 {offsets = [2, 0, 0], sizes = [2, 8, 8], strides = [1, 1, 1]} : vector<8x8x8xf32> to vector<2x8x8xf32>
    %73 = vector.shape_cast %72 : vector<2x8x8xf32> to vector<16x8xf32>
    %c0_20 = arith.constant 0 : index
    %c8 = arith.constant 8 : index
    %74 = vector.load %arg14[%c0_20, %c8] : memref<16x32xf32, #tpu.memory_space<vmem>>, vector<16x8xf32>
    tpu.vector_store %arg14[%c0_20, %c8], %73 {strides = array<i32>} : memref<16x32xf32, #tpu.memory_space<vmem>>, vector<16x8xf32>,
    %75 = vector.extract_strided_slice %68 {offsets = [4, 0, 0], sizes = [2, 8, 8], strides = [1, 1, 1]} : vector<8x8x8xf32> to vector<2x8x8xf32>
    %76 = vector.shape_cast %75 : vector<2x8x8xf32> to vector<16x8xf32>
    %c0_21 = arith.constant 0 : index
    %c16 = arith.constant 16 : index
    %77 = vector.load %arg14[%c0_21, %c16] : memref<16x32xf32, #tpu.memory_space<vmem>>, vector<16x8xf32>
    tpu.vector_store %arg14[%c0_21, %c16], %76 {strides = array<i32>} : memref<16x32xf32, #tpu.memory_space<vmem>>, vector<16x8xf32>,
    %78 = vector.extract_strided_slice %68 {offsets = [6, 0, 0], sizes = [2, 8, 8], strides = [1, 1, 1]} : vector<8x8x8xf32> to vector<2x8x8xf32>
    %79 = vector.shape_cast %78 : vector<2x8x8xf32> to vector<16x8xf32>
    %c0_22 = arith.constant 0 : index
    %c24 = arith.constant 24 : index
    %80 = vector.load %arg14[%c0_22, %c24] : memref<16x32xf32, #tpu.memory_space<vmem>>, vector<16x8xf32>
    tpu.vector_store %arg14[%c0_22, %c24], %79 {strides = array<i32>} : memref<16x32xf32, #tpu.memory_space<vmem>>, vector<16x8xf32>,
    %c0_23 = arith.constant 0 : index
    %c0_24 = arith.constant 0 : index
    %81 = vector.load %arg14[%c0_23, %c0_24] : memref<16x32xf32, #tpu.memory_space<vmem>>, vector<16x32xf32>
    %c0_25 = arith.constant 0 : index
    %c0_26 = arith.constant 0 : index
    %82 = vector.load %arg5[%c0_25, %c0_26] : memref<32x32xf32, #tpu.memory_space<vmem>>, vector<32x32xf32>
    %cst_27 = arith.constant dense<0.000000e+00> : vector<16x32xf32>
    %83 = tpu.matmul %81, %82, %cst_27 {dimension_numbers = #tpu.dot_dimension_numbers<[1], [0], [0], [1], [0, 0, 1, 1], [], []>} : vector<16x32xf32>, vector<32x32xf32>, vector<16x32xf32> -> vector<16x32xf32>
    %c0_28 = arith.constant 0 : index
    %c0_29 = arith.constant 0 : index
    %84 = vector.load %arg6[%c0_28, %c0_29] : memref<1x32xf32, #tpu.memory_space<vmem>>, vector<1x32xf32>
    %85 = vector.broadcast %84 : vector<1x32xf32> to vector<16x32xf32>
    %86 = arith.addf %83, %85 : vector<16x32xf32>
    %87 = arith.addf %86, %0 : vector<16x32xf32>
    %c0_30 = arith.constant 0 : index
    %c0_31 = arith.constant 0 : index
    %88 = vector.load %arg7[%c0_30, %c0_31] : memref<1x32xf32, #tpu.memory_space<vmem>>, vector<1x32xf32>
    %c0_32 = arith.constant 0 : index
    %c0_33 = arith.constant 0 : index
    %89 = vector.load %arg8[%c0_32, %c0_33] : memref<1x32xf32, #tpu.memory_space<vmem>>, vector<1x32xf32>
    %cst_34 = arith.constant dense<0.000000e+00> : vector<16xf32>
    %90 = vector.multi_reduction <add>, %87, %cst_34 [1] : vector<16x32xf32> to vector<16xf32>
    %91 = vector.shape_cast %90 : vector<16xf32> to vector<16x1xf32>
    %cst_35 = arith.constant 3.125000e-02 : f32
    %92 = vector.broadcast %cst_35 : f32 to vector<16x1xf32>
    %93 = arith.mulf %91, %92 : vector<16x1xf32>
    %94 = vector.broadcast %93 : vector<16x1xf32> to vector<16x32xf32>
    %95 = arith.subf %87, %94 : vector<16x32xf32>
    %96 = arith.mulf %95, %95 : vector<16x32xf32>
    %cst_36 = arith.constant dense<0.000000e+00> : vector<16xf32>
    %97 = vector.multi_reduction <add>, %96, %cst_36 [1] : vector<16x32xf32> to vector<16xf32>
    %98 = vector.shape_cast %97 : vector<16xf32> to vector<16x1xf32>
    %cst_37 = arith.constant 3.125000e-02 : f32
    %99 = vector.broadcast %cst_37 : f32 to vector<16x1xf32>
    %100 = arith.mulf %98, %99 : vector<16x1xf32>
    %cst_38 = arith.constant 9.99999997E-7 : f32
    %101 = vector.broadcast %cst_38 : f32 to vector<16x1xf32>
    %102 = arith.addf %100, %101 : vector<16x1xf32>
    %103 = math.rsqrt %102 : vector<16x1xf32>
    %104 = vector.broadcast %103 : vector<16x1xf32> to vector<16x32xf32>
    %105 = arith.mulf %95, %104 : vector<16x32xf32>
    %106 = vector.broadcast %88 : vector<1x32xf32> to vector<16x32xf32>
    %107 = arith.mulf %105, %106 : vector<16x32xf32>
    %108 = vector.broadcast %89 : vector<1x32xf32> to vector<16x32xf32>
    %109 = arith.addf %107, %108 : vector<16x32xf32>
    %c0_39 = arith.constant 0 : index
    %c0_40 = arith.constant 0 : index
    %110 = vector.load %arg9[%c0_39, %c0_40] : memref<32x128xf32, #tpu.memory_space<vmem>>, vector<32x128xf32>
    %cst_41 = arith.constant dense<0.000000e+00> : vector<16x128xf32>
    %111 = tpu.matmul %109, %110, %cst_41 {dimension_numbers = #tpu.dot_dimension_numbers<[1], [0], [0], [1], [0, 0, 1, 1], [], []>} : vector<16x32xf32>, vector<32x128xf32>, vector<16x128xf32> -> vector<16x128xf32>
    %c0_42 = arith.constant 0 : index
    %c0_43 = arith.constant 0 : index
    %112 = vector.load %arg10[%c0_42, %c0_43] : memref<1x128xf32, #tpu.memory_space<vmem>>, vector<1x128xf32>
    %113 = vector.broadcast %112 : vector<1x128xf32> to vector<16x128xf32>
    %114 = arith.addf %111, %113 : vector<16x128xf32>
    %cst_44 = arith.constant 5.000000e-01 : f32
    %115 = vector.broadcast %cst_44 : f32 to vector<16x128xf32>
    %116 = arith.mulf %115, %114 : vector<16x128xf32>
    %cst_45 = arith.constant 0.707106769 : f32
    %117 = vector.broadcast %cst_45 : f32 to vector<16x128xf32>
    %118 = arith.mulf %114, %117 : vector<16x128xf32>
    %119 = math.erf %118 : vector<16x128xf32>
    %cst_46 = arith.constant 1.000000e+00 : f32
    %120 = vector.broadcast %cst_46 : f32 to vector<16x128xf32>
    %121 = arith.addf %120, %119 : vector<16x128xf32>
    %122 = arith.mulf %116, %121 : vector<16x128xf32>
    %c0_47 = arith.constant 0 : index
    %c0_48 = arith.constant 0 : index
    %123 = vector.load %arg11[%c0_47, %c0_48] : memref<128x32xf32, #tpu.memory_space<vmem>>, vector<128x32xf32>
    %cst_49 = arith.constant dense<0.000000e+00> : vector<16x32xf32>
    %124 = tpu.matmul %122, %123, %cst_49 {dimension_numbers = #tpu.dot_dimension_numbers<[1], [0], [0], [1], [0, 0, 1, 1], [], []>} : vector<16x128xf32>, vector<128x32xf32>, vector<16x32xf32> -> vector<16x32xf32>
    %c0_50 = arith.constant 0 : index
    %c0_51 = arith.constant 0 : index
    %125 = vector.load %arg12[%c0_50, %c0_51] : memref<1x32xf32, #tpu.memory_space<vmem>>, vector<1x32xf32>
    %126 = vector.broadcast %125 : vector<1x32xf32> to vector<16x32xf32>
    %127 = arith.addf %124, %126 : vector<16x32xf32>
    %128 = arith.addf %127, %87 : vector<16x32xf32>
    %c0_52 = arith.constant 0 : index
    %c0_53 = arith.constant 0 : index
    %129 = vector.load %arg13[%c0_52, %c0_53] : memref<16x32xf32, #tpu.memory_space<vmem>>, vector<16x32xf32>
    tpu.vector_store %arg13[%c0_52, %c0_53], %128 {strides = array<i32>} : memref<16x32xf32, #tpu.memory_space<vmem>>, vector<16x32xf32>,
    return
  }
}

</mosaic_0001>

<llo_original>
// kernel: tpu_custom_call.1
$region0: #{tpu_custom_call.1}
  #allocation0 [shape = 'u32[]', space=smem, size = 0x4, offset = 0x4, fixed_abs, tag = 'smem constant byte address 0x4 - core index']
  #allocation1 [shape = 'u32[144,128]{1,0:T(1,128)}', space=vmem, size = 0x12000, scoped, tag = 'internal scratch']
  #allocation2 [shape = 'f32[16,32]{1,0:T(8,128)}', space=vmem, size = 0x2000, scoped, tag = 'scratch operand']
  %s0 = inlined_call_operand.vmem [shape: f32[16,32], index: 0, kind: input, shape index: {}]
  %s1 = inlined_call_operand.vmem [shape: f32[1,32], index: 1, kind: input, shape index: {}]
  %s2 = inlined_call_operand.vmem [shape: f32[1,32], index: 2, kind: input, shape index: {}]
  %s3 = inlined_call_operand.vmem [shape: f32[32,96], index: 3, kind: input, shape index: {}]
  %s4 = inlined_call_operand.vmem [shape: f32[1,96], index: 4, kind: input, shape index: {}]
  %s5 = inlined_call_operand.vmem [shape: f32[32,32], index: 5, kind: input, shape index: {}]
  %s6 = inlined_call_operand.vmem [shape: f32[1,32], index: 6, kind: input, shape index: {}]
  %s7 = inlined_call_operand.vmem [shape: f32[1,32], index: 7, kind: input, shape index: {}]
  %s8 = inlined_call_operand.vmem [shape: f32[1,32], index: 8, kind: input, shape index: {}]
  %s9 = inlined_call_operand.vmem [shape: f32[32,128], index: 9, kind: input, shape index: {}]
  %s10 = inlined_call_operand.vmem [shape: f32[1,128], index: 10, kind: input, shape index: {}]
  %s11 = inlined_call_operand.vmem [shape: f32[128,32], index: 11, kind: input, shape index: {}]
  %s12 = inlined_call_operand.vmem [shape: f32[1,32], index: 12, kind: input, shape index: {}]
  %s13 = inlined_call_operand.hbm [shape: f32[16,32], index: 13, kind: output, shape index: {}]
  %s14 = sld [smem:[#allocation0]]
  $region62: #{tpu_custom_call.1} parent=0
    _
  %s16 = ssub.s32 1, %s14
  %s17 = scalar_select 0, %s16, %s14
  $region1: #{tpu_custom_call.1} parent=0
    #allocation3 [shape = 'u8[8192]{0}', space=vmem, size = 0x2000, scoped, tag = 'output window, operand 0, single buffered']
    #allocation4 [shape = 's32[1]{0}', space=sflag, size = 0x4, scoped, tag = 'scoped memory for tpu_custom_call.1']
    %18 = vsyncpa [#allocation4], 0
    // Predicated region
    $region2: #{tpu_custom_call.1} parent=1 // pred_check
      _
    $region3: #{tpu_custom_call.1} parent=1 // pred_check_branch
      %20 = sbr.rel (0) target = $region5
    $region4: #{tpu_custom_call.1} parent=1 // pred_region
      _
    $region5: #{tpu_custom_call.1} parent=1 // pred_fallthru
      _
    // Predicated region
    $region6: #{tpu_custom_call.1} parent=1 // pred_check
      _
    $region7: #{tpu_custom_call.1} parent=1 // pred_check_branch
      %22 = sbr.rel (0) target = $region9
    $region8: #{tpu_custom_call.1} parent=1 // pred_region
      _
    $region9: #{tpu_custom_call.1} parent=1 // pred_fallthru
      _
    // Predicated region
    $region10: #{tpu_custom_call.1} parent=1 // pred_check
      _
    $region11: #{tpu_custom_call.1} parent=1 // pred_check_branch
      %24 = sbr.rel (0) target = $region13
    $region12: #{tpu_custom_call.1} parent=1 // pred_region
      _
    $region13: #{tpu_custom_call.1} parent=1 // pred_fallthru
      _
    // Predicated region
    $region14: #{tpu_custom_call.1} parent=1 // pred_check
      _
    $region15: #{tpu_custom_call.1} parent=1 // pred_check_branch
      %26 = sbr.rel (0) target = $region17
    $region16: #{tpu_custom_call.1} parent=1 // pred_region
      _
    $region17: #{tpu_custom_call.1} parent=1 // pred_fallthru
      _
    // Predicated region
    $region18: #{tpu_custom_call.1} parent=1 // pred_check
      _
    $region19: #{tpu_custom_call.1} parent=1 // pred_check_branch
      %28 = sbr.rel (0) target = $region21
    $region20: #{tpu_custom_call.1} parent=1 // pred_region
      _
    $region21: #{tpu_custom_call.1} parent=1 // pred_fallthru
      _
    // Predicated region
    $region22: #{tpu_custom_call.1} parent=1 // pred_check
      _
    $region23: #{tpu_custom_call.1} parent=1 // pred_check_branch
      %30 = sbr.rel (0) target = $region25
    $region24: #{tpu_custom_call.1} parent=1 // pred_region
      _
    $region25: #{tpu_custom_call.1} parent=1 // pred_fallthru
      _
    // Predicated region
    $region26: #{tpu_custom_call.1} parent=1 // pred_check
      _
    $region27: #{tpu_custom_call.1} parent=1 // pred_check_branch
      %32 = sbr.rel (0) target = $region29
    $region28: #{tpu_custom_call.1} parent=1 // pred_region
      _
    $region29: #{tpu_custom_call.1} parent=1 // pred_fallthru
      _
    // Predicated region
    $region30: #{tpu_custom_call.1} parent=1 // pred_check
      _
    $region31: #{tpu_custom_call.1} parent=1 // pred_check_branch
      %34 = sbr.rel (0) target = $region33
    $region32: #{tpu_custom_call.1} parent=1 // pred_region
      _
    $region33: #{tpu_custom_call.1} parent=1 // pred_fallthru
      _
    // Predicated region
    $region34: #{tpu_custom_call.1} parent=1 // pred_check
      _
    $region35: #{tpu_custom_call.1} parent=1 // pred_check_branch
      %36 = sbr.rel (0) target = $region37
    $region36: #{tpu_custom_call.1} parent=1 // pred_region
      _
    $region37: #{tpu_custom_call.1} parent=1 // pred_fallthru
      _
    // Predicated region
    $region38: #{tpu_custom_call.1} parent=1 // pred_check
      _
    $region39: #{tpu_custom_call.1} parent=1 // pred_check_branch
      %38 = sbr.rel (0) target = $region41
    $region40: #{tpu_custom_call.1} parent=1 // pred_region
      _
    $region41: #{tpu_custom_call.1} parent=1 // pred_fallthru
      _
    // Predicated region
    $region42: #{tpu_custom_call.1} parent=1 // pred_check
      _
    $region43: #{tpu_custom_call.1} parent=1 // pred_check_branch
      %40 = sbr.rel (0) target = $region45
    $region44: #{tpu_custom_call.1} parent=1 // pred_region
      _
    $region45: #{tpu_custom_call.1} parent=1 // pred_fallthru
      _
    // Predicated region
    $region46: #{tpu_custom_call.1} parent=1 // pred_check
      _
    $region47: #{tpu_custom_call.1} parent=1 // pred_check_branch
      %42 = sbr.rel (0) target = $region49
    $region48: #{tpu_custom_call.1} parent=1 // pred_region
      _
    $region49: #{tpu_custom_call.1} parent=1 // pred_fallthru
      _
    // Predicated region
    $region50: #{tpu_custom_call.1} parent=1 // pred_check
      _
    $region51: #{tpu_custom_call.1} parent=1 // pred_check_branch
      %44 = sbr.rel (0) target = $region53
    $region52: #{tpu_custom_call.1} parent=1 // pred_region
      _
    $region53: #{tpu_custom_call.1} parent=1 // pred_fallthru
      _
    %v45 = vld [vmem:[%s0] sm:$0xff]
    %v46 = vld [vmem:[%s0 + $0x8] sm:$0xff]
    %v47 = vld [vmem:[%s1] sm:$0x1]
    %v48 = vld [vmem:[%s2] sm:$0x1]
    %vm49 = vcmask 261120
    %v50 = vsel %vm49, %v45, 0.0
    %51 = vadd.xlane.f32.xlu0 %v50
    %v52 = vpop.xlane.xlu0 %51
    %v53 = vsel %vm49, %v46, 0.0
    %54 = vadd.xlane.f32.xlu0 %v53
    %v55 = vpop.xlane.xlu0 %54
    %v56 = vmul.f32 %v52, 0.03125
    %v57 = vmul.f32 %v55, 0.03125
    %v58 = vsub.f32 %v45, %v56
    %v59 = vsub.f32 %v46, %v57
    %v60 = vmul.f32 %v58, %v58
    %v61 = vmul.f32 %v59, %v59
    %v62 = vsel %vm49, %v60, 0.0
    %63 = vadd.xlane.f32.xlu0 %v62
    %v64 = vpop.xlane.xlu0 %63
    %v65 = vsel %vm49, %v61, 0.0
    %66 = vadd.xlane.f32.xlu0 %v65
    %v67 = vpop.xlane.xlu0 %66
    %v68 = vmul.f32 %v64, 0.03125
    %v69 = vmul.f32 %v67, 0.03125
    %v70 = vadd.f32 %v68, 1e-06
    %v71 = vadd.f32 %v69, 1e-06
    %v72 = vrsqrt.pop %v70
    %v73 = vrsqrt.pop %v71
    %v74 = vmul.f32 %v58, %v72
    %v75 = vmul.f32 %v59, %v73
    %v77 = vlaneseq
    %v78 = vshrl.u32 %v77, 7
    %v79 = vsub.s32 0, %v78
    %v80 = vrot.slane %v47, %v79
    %v82 = vmul.f32 %v74, %v80
    %v83 = vmul.f32 %v75, %v80
    %v85 = vlaneseq
    %v86 = vshrl.u32 %v85, 7
    %v87 = vsub.s32 0, %v86
    %v88 = vrot.slane %v48, %v87
    %v90 = vadd.f32 %v82, %v88
    %v91 = vadd.f32 %v83, %v88
    %v92 = vld [vmem:[%s3] sm:$0xff]
    %v93 = vld [vmem:[%s3 + $0x8] sm:$0xff]
    %v94 = vld [vmem:[%s3 + $0x10] sm:$0xff]
    %v95 = vld [vmem:[%s3 + $0x18] sm:$0xff]
    %v96 = vld [vmem:[%s4] sm:$0x1]
    %v98 = vlaneseq
    %v99 = vshrl.u32 %v98, 7
    %v100 = vsub.s32 0, %v99
    %v101 = vrot.slane %v96, %v100
    %v104 = vsel %vm49, %v90, 0
    %v107 = vsel %vm49, %v91, 0
    %109 = vmatprep.subr.mxu0 0.0
    %110 = vmatpush1.msra.mxu0 %v92
    %111 = vmatprep.subr.mxu0 0.0
    %112 = vmatpush1.msra.mxu0 %v93
    %113 = vmatprep.subr.mxu0 0.0
    %114 = vmatpush1.msra.mxu0 %v94
    %115 = vmatprep.subr.mxu0 0.0
    %116 = vmatpush1.msra.mxu0 %v95
    %117 = vmatprep.subr.mxu0 0.0
    %118 = vmatpush1.msra.mxu0 0.0
    %119 = vmatprep.subr.mxu0 0.0
    %120 = vmatpush1.msra.mxu0 0.0
    %121 = vmatprep.subr.mxu0 0.0
    %122 = vmatpush1.msra.mxu0 0.0
    %123 = vmatprep.subr.mxu0 0.0
    %124 = vmatpush1.msra.mxu0 0.0
    %125 = vmatprep.subr.mxu0 0.0
    %126 = vmatpush1.msra.mxu0 0.0
    %127 = vmatprep.subr.mxu0 0.0
    %128 = vmatpush1.msra.mxu0 0.0
    %129 = vmatprep.subr.mxu0 0.0
    %130 = vmatpush1.msra.mxu0 0.0
    %131 = vmatprep.subr.mxu0 0.0
    %132 = vmatpush1.msra.mxu0 0.0
    %133 = vmatprep.subr.mxu0 0.0
    %134 = vmatpush1.msra.mxu0 0.0
    %135 = vmatprep.subr.mxu0 0.0
    %136 = vmatpush1.msra.mxu0 0.0
    %137 = vmatprep.subr.mxu0 0.0
    %138 = vmatpush1.msra.mxu0 0.0
    %139 = vmatprep.subr.mxu0 0.0
    %140 = vmatpush1.msra.mxu0 0.0
    %141 = vmatprep.subr.mxu0 0.0
    %142 = vmatpush1.msra.mxu0 0.0
    %143 = vmatprep.subr.mxu0 0.0
    %144 = vmatpush1.msra.mxu0 0.0
    %145 = vmatprep.subr.mxu0 0.0
    %146 = vmatpush1.msra.mxu0 0.0
    %147 = vmatprep.subr.mxu0 0.0
    %148 = vmatpush1.msra.mxu0 0.0
    %149 = vmatprep.subr.mxu0 0.0
    %150 = vmatpush1.msra.mxu0 0.0
    %151 = vmatprep.subr.mxu0 0.0
    %152 = vmatpush1.msra.mxu0 0.0
    %153 = vmatprep.subr.mxu0 0.0
    %154 = vmatpush1.msra.mxu0 0.0
    %155 = vmatprep.subr.mxu0 0.0
    %156 = vmatpush1.msra.mxu0 0.0
    %157 = vmatprep.subr.mxu0 0.0
    %158 = vmatpush1.msra.mxu0 0.0
    %159 = vmatprep.subr.mxu0 0.0
    %160 = vmatpush1.msra.mxu0 0.0
    %161 = vmatprep.subr.mxu0 0.0
    %162 = vmatpush1.msra.mxu0 0.0
    %163 = vmatprep.subr.mxu0 0.0
    %164 = vmatpush1.msra.mxu0 0.0
    %165 = vmatprep.subr.mxu0 0.0
    %166 = vmatpush1.msra.mxu0 0.0
    %167 = vmatprep.subr.mxu0 0.0
    %168 = vmatpush1.msra.mxu0 0.0
    %169 = vmatprep.subr.mxu0 0.0
    %170 = vmatpush1.msra.mxu0 0.0
    %171 = vmatprep.subr.mxu0 0.0
    %172 = vmatpush1.msra.mxu0 0.0
    %173 = vmatprep.mubr.f32.mxu0 0.0
    %174 = vmatmul.mubr.f32.gmra.mrb[0].mxu0 %v104
    %v175 = vpop.f32.mrb[0].mxu0
    %v176 = vadd.f32 %v101, %v175
    %v177 = vpop.f32.mrb[0].mxu0
    %178 = vmatprep.mubr.f32.mxu0 0.0
    %179 = vmatmul.mubr.f32.gmra.mrb[0].mxu0 %v107
    %v180 = vpop.f32.mrb[0].mxu0
    %v181 = vadd.f32 %v101, %v180
    %v182 = vpop.f32.mrb[0].mxu0
    %183 = vdwg.mxu0
    %186 = vrot.lane.b32.xlu0 %v176, 120
    %v187 = vpop.permute.xlu0 %186
    %188 = vrot.lane.b32.xlu0 %v181, 120
    %v189 = vpop.permute.xlu0 %188
    %190 = vrot.lane.b32.xlu0 %v176, 112
    %v191 = vpop.permute.xlu0 %190
    %192 = vrot.lane.b32.xlu0 %v181, 112
    %v193 = vpop.permute.xlu0 %192
    %194 = vrot.lane.b32.xlu0 %v176, 104
    %v195 = vpop.permute.xlu0 %194
    %196 = vrot.lane.b32.xlu0 %v181, 104
    %v197 = vpop.permute.xlu0 %196
    %198 = vrot.lane.b32.xlu0 %v176, 96
    %v199 = vpop.permute.xlu0 %198
    %vm200 = vcmask 64512
    %v201 = vsel %vm200, %v176, 0
    %v203 = vsel %vm200, %v199, 0
    %205 = vmatprep.subr.mxu0 0.0
    %206 = vmatpush1.xpose.msra.mxu0 %v203
    %207 = vmatprep.subr.mxu0 0.0
    %208 = vmatpush1.xpose.msra.mxu0 0.0
    %209 = vmatprep.subr.mxu0 0.0
    %210 = vmatpush1.xpose.msra.mxu0 0.0
    %211 = vmatprep.subr.mxu0 0.0
    %212 = vmatpush1.xpose.msra.mxu0 0.0
    %213 = vmatprep.subr.mxu0 0.0
    %214 = vmatpush1.xpose.msra.mxu0 0.0
    %215 = vmatprep.subr.mxu0 0.0
    %216 = vmatpush1.xpose.msra.mxu0 0.0
    %217 = vmatprep.subr.mxu0 0.0
    %218 = vmatpush1.xpose.msra.mxu0 0.0
    %219 = vmatprep.subr.mxu0 0.0
    %220 = vmatpush1.xpose.msra.mxu0 0.0
    %221 = vmatprep.subr.mxu0 0.0
    %222 = vmatpush1.xpose.msra.mxu0 0.0
    %223 = vmatprep.subr.mxu0 0.0
    %224 = vmatpush1.xpose.msra.mxu0 0.0
    %225 = vmatprep.subr.mxu0 0.0
    %226 = vmatpush1.xpose.msra.mxu0 0.0
    %227 = vmatprep.subr.mxu0 0.0
    %228 = vmatpush1.xpose.msra.mxu0 0.0
    %229 = vmatprep.subr.mxu0 0.0
    %230 = vmatpush1.xpose.msra.mxu0 0.0
    %231 = vmatprep.subr.mxu0 0.0
    %232 = vmatpush1.xpose.msra.mxu0 0.0
    %233 = vmatprep.subr.mxu0 0.0
    %234 = vmatpush1.xpose.msra.mxu0 0.0
    %235 = vmatprep.subr.mxu0 0.0
    %236 = vmatpush1.xpose.msra.mxu0 0.0
    %237 = vmatprep.subr.mxu0 0.0
    %238 = vmatpush1.xpose.msra.mxu0 0.0
    %239 = vmatprep.subr.mxu0 0.0
    %240 = vmatpush1.xpose.msra.mxu0 0.0
    %241 = vmatprep.subr.mxu0 0.0
    %242 = vmatpush1.xpose.msra.mxu0 0.0
    %243 = vmatprep.subr.mxu0 0.0
    %244 = vmatpush1.xpose.msra.mxu0 0.0
    %245 = vmatprep.subr.mxu0 0.0
    %246 = vmatpush1.xpose.msra.mxu0 0.0
    %247 = vmatprep.subr.mxu0 0.0
    %248 = vmatpush1.xpose.msra.mxu0 0.0
    %249 = vmatprep.subr.mxu0 0.0
    %250 = vmatpush1.xpose.msra.mxu0 0.0
    %251 = vmatprep.subr.mxu0 0.0
    %252 = vmatpush1.xpose.msra.mxu0 0.0
    %253 = vmatprep.subr.mxu0 0.0
    %254 = vmatpush1.xpose.msra.mxu0 0.0
    %255 = vmatprep.subr.mxu0 0.0
    %256 = vmatpush1.xpose.msra.mxu0 0.0
    %257 = vmatprep.subr.mxu0 0.0
    %258 = vmatpush1.xpose.msra.mxu0 0.0
    %259 = vmatprep.subr.mxu0 0.0
    %260 = vmatpush1.xpose.msra.mxu0 0.0
    %261 = vmatprep.subr.mxu0 0.0
    %262 = vmatpush1.xpose.msra.mxu0 0.0
    %263 = vmatprep.subr.mxu0 0.0
    %264 = vmatpush1.xpose.msra.mxu0 0.0
    %265 = vmatprep.subr.mxu0 0.0
    %266 = vmatpush1.xpose.msra.mxu0 0.0
    %267 = vmatprep.subr.mxu0 0.0
    %268 = vmatpush1.xpose.msra.mxu0 0.0
    %269 = vmatprep.mubr.f32.mxu0 0.0
    %270 = vmatmul.mubr.f32.gmra.mrb[0].mxu0 %v201
    %v271 = vpop.f32.mrb[0].mxu0
    %v272 = vadd.f32 0.0, %v271
    %v273 = vpop.f32.mrb[0].mxu0
    %274 = vdwg.mxu0
    %275 = vrot.lane.b32.xlu0 %v181, 96
    %v276 = vpop.permute.xlu0 %275
    %v277 = vsel %vm200, %v181, 0
    %v279 = vsel %vm200, %v276, 0
    %281 = vmatprep.subr.mxu0 0.0
    %282 = vmatpush1.xpose.msra.mxu0 %v279
    %283 = vmatprep.subr.mxu0 0.0
    %284 = vmatpush1.xpose.msra.mxu0 0.0
    %285 = vmatprep.subr.mxu0 0.0
    %286 = vmatpush1.xpose.msra.mxu0 0.0
    %287 = vmatprep.subr.mxu0 0.0
    %288 = vmatpush1.xpose.msra.mxu0 0.0
    %289 = vmatprep.subr.mxu0 0.0
    %290 = vmatpush1.xpose.msra.mxu0 0.0
    %291 = vmatprep.subr.mxu0 0.0
    %292 = vmatpush1.xpose.msra.mxu0 0.0
    %293 = vmatprep.subr.mxu0 0.0
    %294 = vmatpush1.xpose.msra.mxu0 0.0
    %295 = vmatprep.subr.mxu0 0.0
    %296 = vmatpush1.xpose.msra.mxu0 0.0
    %297 = vmatprep.subr.mxu0 0.0
    %298 = vmatpush1.xpose.msra.mxu0 0.0
    %299 = vmatprep.subr.mxu0 0.0
    %300 = vmatpush1.xpose.msra.mxu0 0.0
    %301 = vmatprep.subr.mxu0 0.0
    %302 = vmatpush1.xpose.msra.mxu0 0.0
    %303 = vmatprep.subr.mxu0 0.0
    %304 = vmatpush1.xpose.msra.mxu0 0.0
    %305 = vmatprep.subr.mxu0 0.0
    %306 = vmatpush1.xpose.msra.mxu0 0.0
    %307 = vmatprep.subr.mxu0 0.0
    %308 = vmatpush1.xpose.msra.mxu0 0.0
    %309 = vmatprep.subr.mxu0 0.0
    %310 = vmatpush1.xpose.msra.mxu0 0.0
    %311 = vmatprep.subr.mxu0 0.0
    %312 = vmatpush1.xpose.msra.mxu0 0.0
    %313 = vmatprep.subr.mxu0 0.0
    %314 = vmatpush1.xpose.msra.mxu0 0.0
    %315 = vmatprep.subr.mxu0 0.0
    %316 = vmatpush1.xpose.msra.mxu0 0.0
    %317 = vmatprep.subr.mxu0 0.0
    %318 = vmatpush1.xpose.msra.mxu0 0.0
    %319 = vmatprep.subr.mxu0 0.0
    %320 = vmatpush1.xpose.msra.mxu0 0.0
    %321 = vmatprep.subr.mxu0 0.0
    %322 = vmatpush1.xpose.msra.mxu0 0.0
    %323 = vmatprep.subr.mxu0 0.0
    %324 = vmatpush1.xpose.msra.mxu0 0.0
    %325 = vmatprep.subr.mxu0 0.0
    %326 = vmatpush1.xpose.msra.mxu0 0.0
    %327 = vmatprep.subr.mxu0 0.0
    %328 = vmatpush1.xpose.msra.mxu0 0.0
    %329 = vmatprep.subr.mxu0 0.0
    %330 = vmatpush1.xpose.msra.mxu0 0.0
    %331 = vmatprep.subr.mxu0 0.0
    %332 = vmatpush1.xpose.msra.mxu0 0.0
    %333 = vmatprep.subr.mxu0 0.0
    %334 = vmatpush1.xpose.msra.mxu0 0.0
    %335 = vmatprep.subr.mxu0 0.0
    %336 = vmatpush1.xpose.msra.mxu0 0.0
    %337 = vmatprep.subr.mxu0 0.0
    %338 = vmatpush1.xpose.msra.mxu0 0.0
    %339 = vmatprep.subr.mxu0 0.0
    %340 = vmatpush1.xpose.msra.mxu0 0.0
    %341 = vmatprep.subr.mxu0 0.0
    %342 = vmatpush1.xpose.msra.mxu0 0.0
    %343 = vmatprep.subr.mxu0 0.0
    %344 = vmatpush1.xpose.msra.mxu0 0.0
    %345 = vmatprep.mubr.f32.mxu0 0.0
    %346 = vmatmul.mubr.f32.gmra.mrb[0].mxu0 %v277
    %v347 = vpop.f32.mrb[0].mxu0
    %v348 = vadd.f32 0.0, %v347
    %v349 = vpop.f32.mrb[0].mxu0
    %350 = vdwg.mxu0
    %351 = vrot.lane.b32.xlu0 %v187, 96
    %v352 = vpop.permute.xlu0 %351
    %v353 = vsel %vm200, %v187, 0
    %v355 = vsel %vm200, %v352, 0
    %357 = vmatprep.subr.mxu0 0.0
    %358 = vmatpush1.xpose.msra.mxu0 %v355
    %359 = vmatprep.subr.mxu0 0.0
    %360 = vmatpush1.xpose.msra.mxu0 0.0
    %361 = vmatprep.subr.mxu0 0.0
    %362 = vmatpush1.xpose.msra.mxu0 0.0
    %363 = vmatprep.subr.mxu0 0.0
    %364 = vmatpush1.xpose.msra.mxu0 0.0
    %365 = vmatprep.subr.mxu0 0.0
    %366 = vmatpush1.xpose.msra.mxu0 0.0
    %367 = vmatprep.subr.mxu0 0.0
    %368 = vmatpush1.xpose.msra.mxu0 0.0
    %369 = vmatprep.subr.mxu0 0.0
    %370 = vmatpush1.xpose.msra.mxu0 0.0
    %371 = vmatprep.subr.mxu0 0.0
    %372 = vmatpush1.xpose.msra.mxu0 0.0
    %373 = vmatprep.subr.mxu0 0.0
    %374 = vmatpush1.xpose.msra.mxu0 0.0
    %375 = vmatprep.subr.mxu0 0.0
    %376 = vmatpush1.xpose.msra.mxu0 0.0
    %377 = vmatprep.subr.mxu0 0.0
    %378 = vmatpush1.xpose.msra.mxu0 0.0
    %379 = vmatprep.subr.mxu0 0.0
    %380 = vmatpush1.xpose.msra.mxu0 0.0
    %381 = vmatprep.subr.mxu0 0.0
    %382 = vmatpush1.xpose.msra.mxu0 0.0
    %383 = vmatprep.subr.mxu0 0.0
    %384 = vmatpush1.xpose.msra.mxu0 0.0
    %385 = vmatprep.subr.mxu0 0.0
    %386 = vmatpush1.xpose.msra.mxu0 0.0
    %387 = vmatprep.subr.mxu0 0.0
    %388 = vmatpush1.xpose.msra.mxu0 0.0
    %389 = vmatprep.subr.mxu0 0.0
    %390 = vmatpush1.xpose.msra.mxu0 0.0
    %391 = vmatprep.subr.mxu0 0.0
    %392 = vmatpush1.xpose.msra.mxu0 0.0
    %393 = vmatprep.subr.mxu0 0.0
    %394 = vmatpush1.xpose.msra.mxu0 0.0
    %395 = vmatprep.subr.mxu0 0.0
    %396 = vmatpush1.xpose.msra.mxu0 0.0
    %397 = vmatprep.subr.mxu0 0.0
    %398 = vmatpush1.xpose.msra.mxu0 0.0
    %399 = vmatprep.subr.mxu0 0.0
    %400 = vmatpush1.xpose.msra.mxu0 0.0
    %401 = vmatprep.subr.mxu0 0.0
    %402 = vmatpush1.xpose.msra.mxu0 0.0
    %403 = vmatprep.subr.mxu0 0.0
    %404 = vmatpush1.xpose.msra.mxu0 0.0
    %405 = vmatprep.subr.mxu0 0.0
    %406 = vmatpush1.xpose.msra.mxu0 0.0
    %407 = vmatprep.subr.mxu0 0.0
    %408 = vmatpush1.xpose.msra.mxu0 0.0
    %409 = vmatprep.subr.mxu0 0.0
    %410 = vmatpush1.xpose.msra.mxu0 0.0
    %411 = vmatprep.subr.mxu0 0.0
    %412 = vmatpush1.xpose.msra.mxu0 0.0
    %413 = vmatprep.subr.mxu0 0.0
    %414 = vmatpush1.xpose.msra.mxu0 0.0
    %415 = vmatprep.subr.mxu0 0.0
    %416 = vmatpush1.xpose.msra.mxu0 0.0
    %417 = vmatprep.subr.mxu0 0.0
    %418 = vmatpush1.xpose.msra.mxu0 0.0
    %419 = vmatprep.subr.mxu0 0.0
    %420 = vmatpush1.xpose.msra.mxu0 0.0
    %421 = vmatprep.mubr.f32.mxu0 0.0
    %422 = vmatmul.mubr.f32.gmra.mrb[0].mxu0 %v353
    %v423 = vpop.f32.mrb[0].mxu0
    %v424 = vadd.f32 0.0, %v423
    %v425 = vpop.f32.mrb[0].mxu0
    %426 = vdwg.mxu0
    %427 = vrot.lane.b32.xlu0 %v189, 96
    %v428 = vpop.permute.xlu0 %427
    %v429 = vsel %vm200, %v189, 0
    %v431 = vsel %vm200, %v428, 0
    %433 = vmatprep.subr.mxu0 0.0
    %434 = vmatpush1.xpose.msra.mxu0 %v431
    %435 = vmatprep.subr.mxu0 0.0
    %436 = vmatpush1.xpose.msra.mxu0 0.0
    %437 = vmatprep.subr.mxu0 0.0
    %438 = vmatpush1.xpose.msra.mxu0 0.0
    %439 = vmatprep.subr.mxu0 0.0
    %440 = vmatpush1.xpose.msra.mxu0 0.0
    %441 = vmatprep.subr.mxu0 0.0
    %442 = vmatpush1.xpose.msra.mxu0 0.0
    %443 = vmatprep.subr.mxu0 0.0
    %444 = vmatpush1.xpose.msra.mxu0 0.0
    %445 = vmatprep.subr.mxu0 0.0
    %446 = vmatpush1.xpose.msra.mxu0 0.0
    %447 = vmatprep.subr.mxu0 0.0
    %448 = vmatpush1.xpose.msra.mxu0 0.0
    %449 = vmatprep.subr.mxu0 0.0
    %450 = vmatpush1.xpose.msra.mxu0 0.0
    %451 = vmatprep.subr.mxu0 0.0
    %452 = vmatpush1.xpose.msra.mxu0 0.0
    %453 = vmatprep.subr.mxu0 0.0
    %454 = vmatpush1.xpose.msra.mxu0 0.0
    %455 = vmatprep.subr.mxu0 0.0
    %456 = vmatpush1.xpose.msra.mxu0 0.0
    %457 = vmatprep.subr.mxu0 0.0
    %458 = vmatpush1.xpose.msra.mxu0 0.0
    %459 = vmatprep.subr.mxu0 0.0
    %460 = vmatpush1.xpose.msra.mxu0 0.0
    %461 = vmatprep.subr.mxu0 0.0
    %462 = vmatpush1.xpose.msra.mxu0 0.0
    %463 = vmatprep.subr.mxu0 0.0
    %464 = vmatpush1.xpose.msra.mxu0 0.0
    %465 = vmatprep.subr.mxu0 0.0
    %466 = vmatpush1.xpose.msra.mxu0 0.0
    %467 = vmatprep.subr.mxu0 0.0
    %468 = vmatpush1.xpose.msra.mxu0 0.0
    %469 = vmatprep.subr.mxu0 0.0
    %470 = vmatpush1.xpose.msra.mxu0 0.0
    %471 = vmatprep.subr.mxu0 0.0
    %472 = vmatpush1.xpose.msra.mxu0 0.0
    %473 = vmatprep.subr.mxu0 0.0
    %474 = vmatpush1.xpose.msra.mxu0 0.0
    %475 = vmatprep.subr.mxu0 0.0
    %476 = vmatpush1.xpose.msra.mxu0 0.0
    %477 = vmatprep.subr.mxu0 0.0
    %478 = vmatpush1.xpose.msra.mxu0 0.0
    %479 = vmatprep.subr.mxu0 0.0
    %480 = vmatpush1.xpose.msra.mxu0 0.0
    %481 = vmatprep.subr.mxu0 0.0
    %482 = vmatpush1.xpose.msra.mxu0 0.0
    %483 = vmatprep.subr.mxu0 0.0
    %484 = vmatpush1.xpose.msra.mxu0 0.0
    %485 = vmatprep.subr.mxu0 0.0
    %486 = vmatpush1.xpose.msra.mxu0 0.0
    %487 = vmatprep.subr.mxu0 0.0
    %488 = vmatpush1.xpose.msra.mxu0 0.0
    %489 = vmatprep.subr.mxu0 0.0
    %490 = vmatpush1.xpose.msra.mxu0 0.0
    %491 = vmatprep.subr.mxu0 0.0
    %492 = vmatpush1.xpose.msra.mxu0 0.0
    %493 = vmatprep.subr.mxu0 0.0
    %494 = vmatpush1.xpose.msra.mxu0 0.0
    %495 = vmatprep.subr.mxu0 0.0
    %496 = vmatpush1.xpose.msra.mxu0 0.0
    %497 = vmatprep.mubr.f32.mxu0 0.0
    %498 = vmatmul.mubr.f32.gmra.mrb[0].mxu0 %v429
    %v499 = vpop.f32.mrb[0].mxu0
    %v500 = vadd.f32 0.0, %v499
    %v501 = vpop.f32.mrb[0].mxu0
    %502 = vdwg.mxu0
    %503 = vrot.lane.b32.xlu0 %v191, 96
    %v504 = vpop.permute.xlu0 %503
    %v505 = vsel %vm200, %v191, 0
    %v507 = vsel %vm200, %v504, 0
    %509 = vmatprep.subr.mxu0 0.0
    %510 = vmatpush1.xpose.msra.mxu0 %v507
    %511 = vmatprep.subr.mxu0 0.0
    %512 = vmatpush1.xpose.msra.mxu0 0.0
    %513 = vmatprep.subr.mxu0 0.0
    %514 = vmatpush1.xpose.msra.mxu0 0.0
    %515 = vmatprep.subr.mxu0 0.0
    %516 = vmatpush1.xpose.msra.mxu0 0.0
    %517 = vmatprep.subr.mxu0 0.0
    %518 = vmatpush1.xpose.msra.mxu0 0.0
    %519 = vmatprep.subr.mxu0 0.0
    %520 = vmatpush1.xpose.msra.mxu0 0.0
    %521 = vmatprep.subr.mxu0 0.0
    %522 = vmatpush1.xpose.msra.mxu0 0.0
    %523 = vmatprep.subr.mxu0 0.0
    %524 = vmatpush1.xpose.msra.mxu0 0.0
    %525 = vmatprep.subr.mxu0 0.0
    %526 = vmatpush1.xpose.msra.mxu0 0.0
    %527 = vmatprep.subr.mxu0 0.0
    %528 = vmatpush1.xpose.msra.mxu0 0.0
    %529 = vmatprep.subr.mxu0 0.0
    %530 = vmatpush1.xpose.msra.mxu0 0.0
    %531 = vmatprep.subr.mxu0 0.0
    %532 = vmatpush1.xpose.msra.mxu0 0.0
    %533 = vmatprep.subr.mxu0 0.0
    %534 = vmatpush1.xpose.msra.mxu0 0.0
    %535 = vmatprep.subr.mxu0 0.0
    %536 = vmatpush1.xpose.msra.mxu0 0.0
    %537 = vmatprep.subr.mxu0 0.0
    %538 = vmatpush1.xpose.msra.mxu0 0.0
    %539 = vmatprep.subr.mxu0 0.0
    %540 = vmatpush1.xpose.msra.mxu0 0.0
    %541 = vmatprep.subr.mxu0 0.0
    %542 = vmatpush1.xpose.msra.mxu0 0.0
    %543 = vmatprep.subr.mxu0 0.0
    %544 = vmatpush1.xpose.msra.mxu0 0.0
    %545 = vmatprep.subr.mxu0 0.0
    %546 = vmatpush1.xpose.msra.mxu0 0.0
    %547 = vmatprep.subr.mxu0 0.0
    %548 = vmatpush1.xpose.msra.mxu0 0.0
    %549 = vmatprep.subr.mxu0 0.0
    %550 = vmatpush1.xpose.msra.mxu0 0.0
    %551 = vmatprep.subr.mxu0 0.0
    %552 = vmatpush1.xpose.msra.mxu0 0.0
    %553 = vmatprep.subr.mxu0 0.0
    %554 = vmatpush1.xpose.msra.mxu0 0.0
    %555 = vmatprep.subr.mxu0 0.0
    %556 = vmatpush1.xpose.msra.mxu0 0.0
    %557 = vmatprep.subr.mxu0 0.0
    %558 = vmatpush1.xpose.msra.mxu0 0.0
    %559 = vmatprep.subr.mxu0 0.0
    %560 = vmatpush1.xpose.msra.mxu0 0.0
    %561 = vmatprep.subr.mxu0 0.0
    %562 = vmatpush1.xpose.msra.mxu0 0.0
    %563 = vmatprep.subr.mxu0 0.0
    %564 = vmatpush1.xpose.msra.mxu0 0.0
    %565 = vmatprep.subr.mxu0 0.0
    %566 = vmatpush1.xpose.msra.mxu0 0.0
    %567 = vmatprep.subr.mxu0 0.0
    %568 = vmatpush1.xpose.msra.mxu0 0.0
    %569 = vmatprep.subr.mxu0 0.0
    %570 = vmatpush1.xpose.msra.mxu0 0.0
    %571 = vmatprep.subr.mxu0 0.0
    %572 = vmatpush1.xpose.msra.mxu0 0.0
    %573 = vmatprep.mubr.f32.mxu0 0.0
    %574 = vmatmul.mubr.f32.gmra.mrb[0].mxu0 %v505
    %v575 = vpop.f32.mrb[0].mxu0
    %v576 = vadd.f32 0.0, %v575
    %v577 = vpop.f32.mrb[0].mxu0
    %578 = vdwg.mxu0
    %579 = vrot.lane.b32.xlu0 %v193, 96
    %v580 = vpop.permute.xlu0 %579
    %v581 = vsel %vm200, %v193, 0
    %v583 = vsel %vm200, %v580, 0
    %585 = vmatprep.subr.mxu0 0.0
    %586 = vmatpush1.xpose.msra.mxu0 %v583
    %587 = vmatprep.subr.mxu0 0.0
    %588 = vmatpush1.xpose.msra.mxu0 0.0
    %589 = vmatprep.subr.mxu0 0.0
    %590 = vmatpush1.xpose.msra.mxu0 0.0
    %591 = vmatprep.subr.mxu0 0.0
    %592 = vmatpush1.xpose.msra.mxu0 0.0
    %593 = vmatprep.subr.mxu0 0.0
    %594 = vmatpush1.xpose.msra.mxu0 0.0
    %595 = vmatprep.subr.mxu0 0.0
    %596 = vmatpush1.xpose.msra.mxu0 0.0
    %597 = vmatprep.subr.mxu0 0.0
    %598 = vmatpush1.xpose.msra.mxu0 0.0
    %599 = vmatprep.subr.mxu0 0.0
    %600 = vmatpush1.xpose.msra.mxu0 0.0
    %601 = vmatprep.subr.mxu0 0.0
    %602 = vmatpush1.xpose.msra.mxu0 0.0
    %603 = vmatprep.subr.mxu0 0.0
    %604 = vmatpush1.xpose.msra.mxu0 0.0
    %605 = vmatprep.subr.mxu0 0.0
    %606 = vmatpush1.xpose.msra.mxu0 0.0
    %607 = vmatprep.subr.mxu0 0.0
    %608 = vmatpush1.xpose.msra.mxu0 0.0
    %609 = vmatprep.subr.mxu0 0.0
    %610 = vmatpush1.xpose.msra.mxu0 0.0
    %611 = vmatprep.subr.mxu0 0.0
    %612 = vmatpush1.xpose.msra.mxu0 0.0
    %613 = vmatprep.subr.mxu0 0.0
    %614 = vmatpush1.xpose.msra.mxu0 0.0
    %615 = vmatprep.subr.mxu0 0.0
    %616 = vmatpush1.xpose.msra.mxu0 0.0
    %617 = vmatprep.subr.mxu0 0.0
    %618 = vmatpush1.xpose.msra.mxu0 0.0
    %619 = vmatprep.subr.mxu0 0.0
    %620 = vmatpush1.xpose.msra.mxu0 0.0
    %621 = vmatprep.subr.mxu0 0.0
    %622 = vmatpush1.xpose.msra.mxu0 0.0
    %623 = vmatprep.subr.mxu0 0.0
    %624 = vmatpush1.xpose.msra.mxu0 0.0
    %625 = vmatprep.subr.mxu0 0.0
    %626 = vmatpush1.xpose.msra.mxu0 0.0
    %627 = vmatprep.subr.mxu0 0.0
    %628 = vmatpush1.xpose.msra.mxu0 0.0
    %629 = vmatprep.subr.mxu0 0.0
    %630 = vmatpush1.xpose.msra.mxu0 0.0
    %631 = vmatprep.subr.mxu0 0.0
    %632 = vmatpush1.xpose.msra.mxu0 0.0
    %633 = vmatprep.subr.mxu0 0.0
    %634 = vmatpush1.xpose.msra.mxu0 0.0
    %635 = vmatprep.subr.mxu0 0.0
    %636 = vmatpush1.xpose.msra.mxu0 0.0
    %637 = vmatprep.subr.mxu0 0.0
    %638 = vmatpush1.xpose.msra.mxu0 0.0
    %639 = vmatprep.subr.mxu0 0.0
    %640 = vmatpush1.xpose.msra.mxu0 0.0
    %641 = vmatprep.subr.mxu0 0.0
    %642 = vmatpush1.xpose.msra.mxu0 0.0
    %643 = vmatprep.subr.mxu0 0.0
    %644 = vmatpush1.xpose.msra.mxu0 0.0
    %645 = vmatprep.subr.mxu0 0.0
    %646 = vmatpush1.xpose.msra.mxu0 0.0
    %647 = vmatprep.subr.mxu0 0.0
    %648 = vmatpush1.xpose.msra.mxu0 0.0
    %649 = vmatprep.mubr.f32.mxu0 0.0
    %650 = vmatmul.mubr.f32.gmra.mrb[0].mxu0 %v581
    %v651 = vpop.f32.mrb[0].mxu0
    %v652 = vadd.f32 0.0, %v651
    %v653 = vpop.f32.mrb[0].mxu0
    %654 = vdwg.mxu0
    %655 = vrot.lane.b32.xlu0 %v195, 96
    %v656 = vpop.permute.xlu0 %655
    %v657 = vsel %vm200, %v195, 0
    %v659 = vsel %vm200, %v656, 0
    %661 = vmatprep.subr.mxu0 0.0
    %662 = vmatpush1.xpose.msra.mxu0 %v659
    %663 = vmatprep.subr.mxu0 0.0
    %664 = vmatpush1.xpose.msra.mxu0 0.0
    %665 = vmatprep.subr.mxu0 0.0
    %666 = vmatpush1.xpose.msra.mxu0 0.0
    %667 = vmatprep.subr.mxu0 0.0
    %668 = vmatpush1.xpose.msra.mxu0 0.0
    %669 = vmatprep.subr.mxu0 0.0
    %670 = vmatpush1.xpose.msra.mxu0 0.0
    %671 = vmatprep.subr.mxu0 0.0
    %672 = vmatpush1.xpose.msra.mxu0 0.0
    %673 = vmatprep.subr.mxu0 0.0
    %674 = vmatpush1.xpose.msra.mxu0 0.0
    %675 = vmatprep.subr.mxu0 0.0
    %676 = vmatpush1.xpose.msra.mxu0 0.0
    %677 = vmatprep.subr.mxu0 0.0
    %678 = vmatpush1.xpose.msra.mxu0 0.0
    %679 = vmatprep.subr.mxu0 0.0
    %680 = vmatpush1.xpose.msra.mxu0 0.0
    %681 = vmatprep.subr.mxu0 0.0
    %682 = vmatpush1.xpose.msra.mxu0 0.0
    %683 = vmatprep.subr.mxu0 0.0
    %684 = vmatpush1.xpose.msra.mxu0 0.0
    %685 = vmatprep.subr.mxu0 0.0
    %686 = vmatpush1.xpose.msra.mxu0 0.0
    %687 = vmatprep.subr.mxu0 0.0
    %688 = vmatpush1.xpose.msra.mxu0 0.0
    %689 = vmatprep.subr.mxu0 0.0
    %690 = vmatpush1.xpose.msra.mxu0 0.0
    %691 = vmatprep.subr.mxu0 0.0
    %692 = vmatpush1.xpose.msra.mxu0 0.0
    %693 = vmatprep.subr.mxu0 0.0
    %694 = vmatpush1.xpose.msra.mxu0 0.0
    %695 = vmatprep.subr.mxu0 0.0
    %696 = vmatpush1.xpose.msra.mxu0 0.0
    %697 = vmatprep.subr.mxu0 0.0
    %698 = vmatpush1.xpose.msra.mxu0 0.0
    %699 = vmatprep.subr.mxu0 0.0
    %700 = vmatpush1.xpose.msra.mxu0 0.0
    %701 = vmatprep.subr.mxu0 0.0
    %702 = vmatpush1.xpose.msra.mxu0 0.0
    %703 = vmatprep.subr.mxu0 0.0
    %704 = vmatpush1.xpose.msra.mxu0 0.0
    %705 = vmatprep.subr.mxu0 0.0
    %706 = vmatpush1.xpose.msra.mxu0 0.0
    %707 = vmatprep.subr.mxu0 0.0
    %708 = vmatpush1.xpose.msra.mxu0 0.0
    %709 = vmatprep.subr.mxu0 0.0
    %710 = vmatpush1.xpose.msra.mxu0 0.0
    %711 = vmatprep.subr.mxu0 0.0
    %712 = vmatpush1.xpose.msra.mxu0 0.0
    %713 = vmatprep.subr.mxu0 0.0
    %714 = vmatpush1.xpose.msra.mxu0 0.0
    %715 = vmatprep.subr.mxu0 0.0
    %716 = vmatpush1.xpose.msra.mxu0 0.0
    %717 = vmatprep.subr.mxu0 0.0
    %718 = vmatpush1.xpose.msra.mxu0 0.0
    %719 = vmatprep.subr.mxu0 0.0
    %720 = vmatpush1.xpose.msra.mxu0 0.0
    %721 = vmatprep.subr.mxu0 0.0
    %722 = vmatpush1.xpose.msra.mxu0 0.0
    %723 = vmatprep.subr.mxu0 0.0
    %724 = vmatpush1.xpose.msra.mxu0 0.0
    %725 = vmatprep.mubr.f32.mxu0 0.0
    %726 = vmatmul.mubr.f32.gmra.mrb[0].mxu0 %v657
    %v727 = vpop.f32.mrb[0].mxu0
    %v728 = vadd.f32 0.0, %v727
    %v729 = vpop.f32.mrb[0].mxu0
    %730 = vdwg.mxu0
    %731 = vrot.lane.b32.xlu0 %v197, 96
    %v732 = vpop.permute.xlu0 %731
    %v733 = vsel %vm200, %v197, 0
    %v735 = vsel %vm200, %v732, 0
    %737 = vmatprep.subr.mxu0 0.0
    %738 = vmatpush1.xpose.msra.mxu0 %v735
    %739 = vmatprep.subr.mxu0 0.0
    %740 = vmatpush1.xpose.msra.mxu0 0.0
    %741 = vmatprep.subr.mxu0 0.0
    %742 = vmatpush1.xpose.msra.mxu0 0.0
    %743 = vmatprep.subr.mxu0 0.0
    %744 = vmatpush1.xpose.msra.mxu0 0.0
    %745 = vmatprep.subr.mxu0 0.0
    %746 = vmatpush1.xpose.msra.mxu0 0.0
    %747 = vmatprep.subr.mxu0 0.0
    %748 = vmatpush1.xpose.msra.mxu0 0.0
    %749 = vmatprep.subr.mxu0 0.0
    %750 = vmatpush1.xpose.msra.mxu0 0.0
    %751 = vmatprep.subr.mxu0 0.0
    %752 = vmatpush1.xpose.msra.mxu0 0.0
    %753 = vmatprep.subr.mxu0 0.0
    %754 = vmatpush1.xpose.msra.mxu0 0.0
    %755 = vmatprep.subr.mxu0 0.0
    %756 = vmatpush1.xpose.msra.mxu0 0.0
    %757 = vmatprep.subr.mxu0 0.0
    %758 = vmatpush1.xpose.msra.mxu0 0.0
    %759 = vmatprep.subr.mxu0 0.0
    %760 = vmatpush1.xpose.msra.mxu0 0.0
    %761 = vmatprep.subr.mxu0 0.0
    %762 = vmatpush1.xpose.msra.mxu0 0.0
    %763 = vmatprep.subr.mxu0 0.0
    %764 = vmatpush1.xpose.msra.mxu0 0.0
    %765 = vmatprep.subr.mxu0 0.0
    %766 = vmatpush1.xpose.msra.mxu0 0.0
    %767 = vmatprep.subr.mxu0 0.0
    %768 = vmatpush1.xpose.msra.mxu0 0.0
    %769 = vmatprep.subr.mxu0 0.0
    %770 = vmatpush1.xpose.msra.mxu0 0.0
    %771 = vmatprep.subr.mxu0 0.0
    %772 = vmatpush1.xpose.msra.mxu0 0.0
    %773 = vmatprep.subr.mxu0 0.0
    %774 = vmatpush1.xpose.msra.mxu0 0.0
    %775 = vmatprep.subr.mxu0 0.0
    %776 = vmatpush1.xpose.msra.mxu0 0.0
    %777 = vmatprep.subr.mxu0 0.0
    %778 = vmatpush1.xpose.msra.mxu0 0.0
    %779 = vmatprep.subr.mxu0 0.0
    %780 = vmatpush1.xpose.msra.mxu0 0.0
    %781 = vmatprep.subr.mxu0 0.0
    %782 = vmatpush1.xpose.msra.mxu0 0.0
    %783 = vmatprep.subr.mxu0 0.0
    %784 = vmatpush1.xpose.msra.mxu0 0.0
    %785 = vmatprep.subr.mxu0 0.0
    %786 = vmatpush1.xpose.msra.mxu0 0.0
    %787 = vmatprep.subr.mxu0 0.0
    %788 = vmatpush1.xpose.msra.mxu0 0.0
    %789 = vmatprep.subr.mxu0 0.0
    %790 = vmatpush1.xpose.msra.mxu0 0.0
    %791 = vmatprep.subr.mxu0 0.0
    %792 = vmatpush1.xpose.msra.mxu0 0.0
    %793 = vmatprep.subr.mxu0 0.0
    %794 = vmatpush1.xpose.msra.mxu0 0.0
    %795 = vmatprep.subr.mxu0 0.0
    %796 = vmatpush1.xpose.msra.mxu0 0.0
    %797 = vmatprep.subr.mxu0 0.0
    %798 = vmatpush1.xpose.msra.mxu0 0.0
    %799 = vmatprep.subr.mxu0 0.0
    %800 = vmatpush1.xpose.msra.mxu0 0.0
    %801 = vmatprep.mubr.f32.mxu0 0.0
    %802 = vmatmul.mubr.f32.gmra.mrb[0].mxu0 %v733
    %v803 = vpop.f32.mrb[0].mxu0
    %v804 = vadd.f32 0.0, %v803
    %v805 = vpop.f32.mrb[0].mxu0
    %806 = vdwg.mxu0
    %v807 = vsel %vm200, %v272, -inf
    %808 = vmax.xlane.f32.xlu0 %v807
    %v809 = vpop.xlane.xlu0 %808
    %v810 = vsel %vm200, %v348, -inf
    %811 = vmax.xlane.f32.xlu0 %v810
    %v812 = vpop.xlane.xlu0 %811
    %v813 = vsel %vm200, %v424, -inf
    %814 = vmax.xlane.f32.xlu0 %v813
    %v815 = vpop.xlane.xlu0 %814
    %v816 = vsel %vm200, %v500, -inf
    %817 = vmax.xlane.f32.xlu0 %v816
    %v818 = vpop.xlane.xlu0 %817
    %v819 = vsel %vm200, %v576, -inf
    %820 = vmax.xlane.f32.xlu0 %v819
    %v821 = vpop.xlane.xlu0 %820
    %v822 = vsel %vm200, %v652, -inf
    %823 = vmax.xlane.f32.xlu0 %v822
    %v824 = vpop.xlane.xlu0 %823
    %v825 = vsel %vm200, %v728, -inf
    %826 = vmax.xlane.f32.xlu0 %v825
    %v827 = vpop.xlane.xlu0 %826
    %v828 = vsel %vm200, %v804, -inf
    %829 = vmax.xlane.f32.xlu0 %v828
    %v830 = vpop.xlane.xlu0 %829
    %v831 = vsub.f32 %v272, %v809
    %v832 = vsub.f32 %v348, %v812
    %v833 = vsub.f32 %v424, %v815
    %v834 = vsub.f32 %v500, %v818
    %v835 = vsub.f32 %v576, %v821
    %v836 = vsub.f32 %v652, %v824
    %v837 = vsub.f32 %v728, %v827
    %v838 = vsub.f32 %v804, %v830
    %v839 = vmul.f32 %v831, 1.442695
    %v840 = vpow.pop %v839
    %v841 = vmul.f32 %v832, 1.442695
    %v842 = vpow.pop %v841
    %v843 = vmul.f32 %v833, 1.442695
    %v844 = vpow.pop %v843
    %v845 = vmul.f32 %v834, 1.442695
    %v846 = vpow.pop %v845
    %v847 = vmul.f32 %v835, 1.442695
    %v848 = vpow.pop %v847
    %v849 = vmul.f32 %v836, 1.442695
    %v850 = vpow.pop %v849
    %v851 = vmul.f32 %v837, 1.442695
    %v852 = vpow.pop %v851
    %v853 = vmul.f32 %v838, 1.442695
    %v854 = vpow.pop %v853
    %v855 = vsel %vm200, %v840, 0.0
    %856 = vadd.xlane.f32.xlu0 %v855
    %v857 = vpop.xlane.xlu0 %856
    %v858 = vsel %vm200, %v842, 0.0
    %859 = vadd.xlane.f32.xlu0 %v858
    %v860 = vpop.xlane.xlu0 %859
    %v861 = vsel %vm200, %v844, 0.0
    %862 = vadd.xlane.f32.xlu0 %v861
    %v863 = vpop.xlane.xlu0 %862
    %v864 = vsel %vm200, %v846, 0.0
    %865 = vadd.xlane.f32.xlu0 %v864
    %v866 = vpop.xlane.xlu0 %865
    %v867 = vsel %vm200, %v848, 0.0
    %868 = vadd.xlane.f32.xlu0 %v867
    %v869 = vpop.xlane.xlu0 %868
    %v870 = vsel %vm200, %v850, 0.0
    %871 = vadd.xlane.f32.xlu0 %v870
    %v872 = vpop.xlane.xlu0 %871
    %v873 = vsel %vm200, %v852, 0.0
    %874 = vadd.xlane.f32.xlu0 %v873
    %v875 = vpop.xlane.xlu0 %874
    %v876 = vsel %vm200, %v854, 0.0
    %877 = vadd.xlane.f32.xlu0 %v876
    %v878 = vpop.xlane.xlu0 %877
    %v879 = vrcp.pop %v857
    %v880 = vmul.f32 %v840, %v879
    %v881 = vrcp.pop %v860
    %v882 = vmul.f32 %v842, %v881
    %v883 = vrcp.pop %v863
    %v884 = vmul.f32 %v844, %v883
    %v885 = vrcp.pop %v866
    %v886 = vmul.f32 %v846, %v885
    %v887 = vrcp.pop %v869
    %v888 = vmul.f32 %v848, %v887
    %v889 = vrcp.pop %v872
    %v890 = vmul.f32 %v850, %v889
    %v891 = vrcp.pop %v875
    %v892 = vmul.f32 %v852, %v891
    %v893 = vrcp.pop %v878
    %v894 = vmul.f32 %v854, %v893
    %895 = vrot.lane.b32.xlu0 %v176, 64
    %v896 = vpop.permute.xlu0 %895
    %v899 = vsel %vm200, %v880, 0
    %901 = vmatprep.subr.mxu0 0.0
    %902 = vmatpush1.msra.mxu0 %v896
    %903 = vmatprep.subr.mxu0 0.0
    %904 = vmatpush1.msra.mxu0 0.0
    %905 = vmatprep.subr.mxu0 0.0
    %906 = vmatpush1.msra.mxu0 0.0
    %907 = vmatprep.subr.mxu0 0.0
    %908 = vmatpush1.msra.mxu0 0.0
    %909 = vmatprep.subr.mxu0 0.0
    %910 = vmatpush1.msra.mxu0 0.0
    %911 = vmatprep.subr.mxu0 0.0
    %912 = vmatpush1.msra.mxu0 0.0
    %913 = vmatprep.subr.mxu0 0.0
    %914 = vmatpush1.msra.mxu0 0.0
    %915 = vmatprep.subr.mxu0 0.0
    %916 = vmatpush1.msra.mxu0 0.0
    %917 = vmatprep.subr.mxu0 0.0
    %918 = vmatpush1.msra.mxu0 0.0
    %919 = vmatprep.subr.mxu0 0.0
    %920 = vmatpush1.msra.mxu0 0.0
    %921 = vmatprep.subr.mxu0 0.0
    %922 = vmatpush1.msra.mxu0 0.0
    %923 = vmatprep.subr.mxu0 0.0
    %924 = vmatpush1.msra.mxu0 0.0
    %925 = vmatprep.subr.mxu0 0.0
    %926 = vmatpush1.msra.mxu0 0.0
    %927 = vmatprep.subr.mxu0 0.0
    %928 = vmatpush1.msra.mxu0 0.0
    %929 = vmatprep.subr.mxu0 0.0
    %930 = vmatpush1.msra.mxu0 0.0
    %931 = vmatprep.subr.mxu0 0.0
    %932 = vmatpush1.msra.mxu0 0.0
    %933 = vmatprep.subr.mxu0 0.0
    %934 = vmatpush1.msra.mxu0 0.0
    %935 = vmatprep.subr.mxu0 0.0
    %936 = vmatpush1.msra.mxu0 0.0
    %937 = vmatprep.subr.mxu0 0.0
    %938 = vmatpush1.msra.mxu0 0.0
    %939 = vmatprep.subr.mxu0 0.0
    %940 = vmatpush1.msra.mxu0 0.0
    %941 = vmatprep.subr.mxu0 0.0
    %942 = vmatpush1.msra.mxu0 0.0
    %943 = vmatprep.subr.mxu0 0.0
    %944 = vmatpush1.msra.mxu0 0.0
    %945 = vmatprep.subr.mxu0 0.0
    %946 = vmatpush1.msra.mxu0 0.0
    %947 = vmatprep.subr.mxu0 0.0
    %948 = vmatpush1.msra.mxu0 0.0
    %949 = vmatprep.subr.mxu0 0.0
    %950 = vmatpush1.msra.mxu0 0.0
    %951 = vmatprep.subr.mxu0 0.0
    %952 = vmatpush1.msra.mxu0 0.0
    %953 = vmatprep.subr.mxu0 0.0
    %954 = vmatpush1.msra.mxu0 0.0
    %955 = vmatprep.subr.mxu0 0.0
    %956 = vmatpush1.msra.mxu0 0.0
    %957 = vmatprep.subr.mxu0 0.0
    %958 = vmatpush1.msra.mxu0 0.0
    %959 = vmatprep.subr.mxu0 0.0
    %960 = vmatpush1.msra.mxu0 0.0
    %961 = vmatprep.subr.mxu0 0.0
    %962 = vmatpush1.msra.mxu0 0.0
    %963 = vmatprep.subr.mxu0 0.0
    %964 = vmatpush1.msra.mxu0 0.0
    %965 = vmatprep.mubr.f32.mxu0 0.0
    %966 = vmatmul.mubr.f32.gmra.mrb[0].mxu0 %v899
    %v967 = vpop.f32.mrb[0].mxu0
    %v968 = vadd.f32 0.0, %v967
    %v969 = vpop.f32.mrb[0].mxu0
    %970 = vdwg.mxu0
    %971 = vrot.lane.b32.xlu0 %v181, 64
    %v972 = vpop.permute.xlu0 %971
    %v975 = vsel %vm200, %v882, 0
    %977 = vmatprep.subr.mxu0 0.0
    %978 = vmatpush1.msra.mxu0 %v972
    %979 = vmatprep.subr.mxu0 0.0
    %980 = vmatpush1.msra.mxu0 0.0
    %981 = vmatprep.subr.mxu0 0.0
    %982 = vmatpush1.msra.mxu0 0.0
    %983 = vmatprep.subr.mxu0 0.0
    %984 = vmatpush1.msra.mxu0 0.0
    %985 = vmatprep.subr.mxu0 0.0
    %986 = vmatpush1.msra.mxu0 0.0
    %987 = vmatprep.subr.mxu0 0.0
    %988 = vmatpush1.msra.mxu0 0.0
    %989 = vmatprep.subr.mxu0 0.0
    %990 = vmatpush1.msra.mxu0 0.0
    %991 = vmatprep.subr.mxu0 0.0
    %992 = vmatpush1.msra.mxu0 0.0
    %993 = vmatprep.subr.mxu0 0.0
    %994 = vmatpush1.msra.mxu0 0.0
    %995 = vmatprep.subr.mxu0 0.0
    %996 = vmatpush1.msra.mxu0 0.0
    %997 = vmatprep.subr.mxu0 0.0
    %998 = vmatpush1.msra.mxu0 0.0
    %999 = vmatprep.subr.mxu0 0.0
    %1000 = vmatpush1.msra.mxu0 0.0
    %1001 = vmatprep.subr.mxu0 0.0
    %1002 = vmatpush1.msra.mxu0 0.0
    %1003 = vmatprep.subr.mxu0 0.0
    %1004 = vmatpush1.msra.mxu0 0.0
    %1005 = vmatprep.subr.mxu0 0.0
    %1006 = vmatpush1.msra.mxu0 0.0
    %1007 = vmatprep.subr.mxu0 0.0
    %1008 = vmatpush1.msra.mxu0 0.0
    %1009 = vmatprep.subr.mxu0 0.0
    %1010 = vmatpush1.msra.mxu0 0.0
    %1011 = vmatprep.subr.mxu0 0.0
    %1012 = vmatpush1.msra.mxu0 0.0
    %1013 = vmatprep.subr.mxu0 0.0
    %1014 = vmatpush1.msra.mxu0 0.0
    %1015 = vmatprep.subr.mxu0 0.0
    %1016 = vmatpush1.msra.mxu0 0.0
    %1017 = vmatprep.subr.mxu0 0.0
    %1018 = vmatpush1.msra.mxu0 0.0
    %1019 = vmatprep.subr.mxu0 0.0
    %1020 = vmatpush1.msra.mxu0 0.0
    %1021 = vmatprep.subr.mxu0 0.0
    %1022 = vmatpush1.msra.mxu0 0.0
    %1023 = vmatprep.subr.mxu0 0.0
    %1024 = vmatpush1.msra.mxu0 0.0
    %1025 = vmatprep.subr.mxu0 0.0
    %1026 = vmatpush1.msra.mxu0 0.0
    %1027 = vmatprep.subr.mxu0 0.0
    %1028 = vmatpush1.msra.mxu0 0.0
    %1029 = vmatprep.subr.mxu0 0.0
    %1030 = vmatpush1.msra.mxu0 0.0
    %1031 = vmatprep.subr.mxu0 0.0
    %1032 = vmatpush1.msra.mxu0 0.0
    %1033 = vmatprep.subr.mxu0 0.0
    %1034 = vmatpush1.msra.mxu0 0.0
    %1035 = vmatprep.subr.mxu0 0.0
    %1036 = vmatpush1.msra.mxu0 0.0
    %1037 = vmatprep.subr.mxu0 0.0
    %1038 = vmatpush1.msra.mxu0 0.0
    %1039 = vmatprep.subr.mxu0 0.0
    %1040 = vmatpush1.msra.mxu0 0.0
    %1041 = vmatprep.mubr.f32.mxu0 0.0
    %1042 = vmatmul.mubr.f32.gmra.mrb[0].mxu0 %v975
    %v1043 = vpop.f32.mrb[0].mxu0
    %v1044 = vadd.f32 0.0, %v1043
    %v1045 = vpop.f32.mrb[0].mxu0
    %1046 = vdwg.mxu0
    %1047 = vrot.lane.b32.xlu0 %v187, 64
    %v1048 = vpop.permute.xlu0 %1047
    %v1051 = vsel %vm200, %v884, 0
    %1053 = vmatprep.subr.mxu0 0.0
    %1054 = vmatpush1.msra.mxu0 %v1048
    %1055 = vmatprep.subr.mxu0 0.0
    %1056 = vmatpush1.msra.mxu0 0.0
    %1057 = vmatprep.subr.mxu0 0.0
    %1058 = vmatpush1.msra.mxu0 0.0
    %1059 = vmatprep.subr.mxu0 0.0
    %1060 = vmatpush1.msra.mxu0 0.0
    %1061 = vmatprep.subr.mxu0 0.0
    %1062 = vmatpush1.msra.mxu0 0.0
    %1063 = vmatprep.subr.mxu0 0.0
    %1064 = vmatpush1.msra.mxu0 0.0
    %1065 = vmatprep.subr.mxu0 0.0
    %1066 = vmatpush1.msra.mxu0 0.0
    %1067 = vmatprep.subr.mxu0 0.0
    %1068 = vmatpush1.msra.mxu0 0.0
    %1069 = vmatprep.subr.mxu0 0.0
    %1070 = vmatpush1.msra.mxu0 0.0
    %1071 = vmatprep.subr.mxu0 0.0
    %1072 = vmatpush1.msra.mxu0 0.0
    %1073 = vmatprep.subr.mxu0 0.0
    %1074 = vmatpush1.msra.mxu0 0.0
    %1075 = vmatprep.subr.mxu0 0.0
    %1076 = vmatpush1.msra.mxu0 0.0
    %1077 = vmatprep.subr.mxu0 0.0
    %1078 = vmatpush1.msra.mxu0 0.0
    %1079 = vmatprep.subr.mxu0 0.0
    %1080 = vmatpush1.msra.mxu0 0.0
    %1081 = vmatprep.subr.mxu0 0.0
    %1082 = vmatpush1.msra.mxu0 0.0
    %1083 = vmatprep.subr.mxu0 0.0
    %1084 = vmatpush1.msra.mxu0 0.0
    %1085 = vmatprep.subr.mxu0 0.0
    %1086 = vmatpush1.msra.mxu0 0.0
    %1087 = vmatprep.subr.mxu0 0.0
    %1088 = vmatpush1.msra.mxu0 0.0
    %1089 = vmatprep.subr.mxu0 0.0
    %1090 = vmatpush1.msra.mxu0 0.0
    %1091 = vmatprep.subr.mxu0 0.0
    %1092 = vmatpush1.msra.mxu0 0.0
    %1093 = vmatprep.subr.mxu0 0.0
    %1094 = vmatpush1.msra.mxu0 0.0
    %1095 = vmatprep.subr.mxu0 0.0
    %1096 = vmatpush1.msra.mxu0 0.0
    %1097 = vmatprep.subr.mxu0 0.0
    %1098 = vmatpush1.msra.mxu0 0.0
    %1099 = vmatprep.subr.mxu0 0.0
    %1100 = vmatpush1.msra.mxu0 0.0
    %1101 = vmatprep.subr.mxu0 0.0
    %1102 = vmatpush1.msra.mxu0 0.0
    %1103 = vmatprep.subr.mxu0 0.0
    %1104 = vmatpush1.msra.mxu0 0.0
    %1105 = vmatprep.subr.mxu0 0.0
    %1106 = vmatpush1.msra.mxu0 0.0
    %1107 = vmatprep.subr.mxu0 0.0
    %1108 = vmatpush1.msra.mxu0 0.0
    %1109 = vmatprep.subr.mxu0 0.0
    %1110 = vmatpush1.msra.mxu0 0.0
    %1111 = vmatprep.subr.mxu0 0.0
    %1112 = vmatpush1.msra.mxu0 0.0
    %1113 = vmatprep.subr.mxu0 0.0
    %1114 = vmatpush1.msra.mxu0 0.0
    %1115 = vmatprep.subr.mxu0 0.0
    %1116 = vmatpush1.msra.mxu0 0.0
    %1117 = vmatprep.mubr.f32.mxu0 0.0
    %1118 = vmatmul.mubr.f32.gmra.mrb[0].mxu0 %v1051
    %v1119 = vpop.f32.mrb[0].mxu0
    %v1120 = vadd.f32 0.0, %v1119
    %v1121 = vpop.f32.mrb[0].mxu0
    %1122 = vdwg.mxu0
    %1123 = vrot.lane.b32.xlu0 %v189, 64
    %v1124 = vpop.permute.xlu0 %1123
    %v1127 = vsel %vm200, %v886, 0
    %1129 = vmatprep.subr.mxu0 0.0
    %1130 = vmatpush1.msra.mxu0 %v1124
    %1131 = vmatprep.subr.mxu0 0.0
    %1132 = vmatpush1.msra.mxu0 0.0
    %1133 = vmatprep.subr.mxu0 0.0
    %1134 = vmatpush1.msra.mxu0 0.0
    %1135 = vmatprep.subr.mxu0 0.0
    %1136 = vmatpush1.msra.mxu0 0.0
    %1137 = vmatprep.subr.mxu0 0.0
    %1138 = vmatpush1.msra.mxu0 0.0
    %1139 = vmatprep.subr.mxu0 0.0
    %1140 = vmatpush1.msra.mxu0 0.0
    %1141 = vmatprep.subr.mxu0 0.0
    %1142 = vmatpush1.msra.mxu0 0.0
    %1143 = vmatprep.subr.mxu0 0.0
    %1144 = vmatpush1.msra.mxu0 0.0
    %1145 = vmatprep.subr.mxu0 0.0
    %1146 = vmatpush1.msra.mxu0 0.0
    %1147 = vmatprep.subr.mxu0 0.0
    %1148 = vmatpush1.msra.mxu0 0.0
    %1149 = vmatprep.subr.mxu0 0.0
    %1150 = vmatpush1.msra.mxu0 0.0
    %1151 = vmatprep.subr.mxu0 0.0
    %1152 = vmatpush1.msra.mxu0 0.0
    %1153 = vmatprep.subr.mxu0 0.0
    %1154 = vmatpush1.msra.mxu0 0.0
    %1155 = vmatprep.subr.mxu0 0.0
    %1156 = vmatpush1.msra.mxu0 0.0
    %1157 = vmatprep.subr.mxu0 0.0
    %1158 = vmatpush1.msra.mxu0 0.0
    %1159 = vmatprep.subr.mxu0 0.0
    %1160 = vmatpush1.msra.mxu0 0.0
    %1161 = vmatprep.subr.mxu0 0.0
    %1162 = vmatpush1.msra.mxu0 0.0
    %1163 = vmatprep.subr.mxu0 0.0
    %1164 = vmatpush1.msra.mxu0 0.0
    %1165 = vmatprep.subr.mxu0 0.0
    %1166 = vmatpush1.msra.mxu0 0.0
    %1167 = vmatprep.subr.mxu0 0.0
    %1168 = vmatpush1.msra.mxu0 0.0
    %1169 = vmatprep.subr.mxu0 0.0
    %1170 = vmatpush1.msra.mxu0 0.0
    %1171 = vmatprep.subr.mxu0 0.0
    %1172 = vmatpush1.msra.mxu0 0.0
    %1173 = vmatprep.subr.mxu0 0.0
    %1174 = vmatpush1.msra.mxu0 0.0
    %1175 = vmatprep.subr.mxu0 0.0
    %1176 = vmatpush1.msra.mxu0 0.0
    %1177 = vmatprep.subr.mxu0 0.0
    %1178 = vmatpush1.msra.mxu0 0.0
    %1179 = vmatprep.subr.mxu0 0.0
    %1180 = vmatpush1.msra.mxu0 0.0
    %1181 = vmatprep.subr.mxu0 0.0
    %1182 = vmatpush1.msra.mxu0 0.0
    %1183 = vmatprep.subr.mxu0 0.0
    %1184 = vmatpush1.msra.mxu0 0.0
    %1185 = vmatprep.subr.mxu0 0.0
    %1186 = vmatpush1.msra.mxu0 0.0
    %1187 = vmatprep.subr.mxu0 0.0
    %1188 = vmatpush1.msra.mxu0 0.0
    %1189 = vmatprep.subr.mxu0 0.0
    %1190 = vmatpush1.msra.mxu0 0.0
    %1191 = vmatprep.subr.mxu0 0.0
    %1192 = vmatpush1.msra.mxu0 0.0
    %1193 = vmatprep.mubr.f32.mxu0 0.0
    %1194 = vmatmul.mubr.f32.gmra.mrb[0].mxu0 %v1127
    %v1195 = vpop.f32.mrb[0].mxu0
    %v1196 = vadd.f32 0.0, %v1195
    %v1197 = vpop.f32.mrb[0].mxu0
    %1198 = vdwg.mxu0
    %1199 = vrot.lane.b32.xlu0 %v191, 64
    %v1200 = vpop.permute.xlu0 %1199
    %v1203 = vsel %vm200, %v888, 0
    %1205 = vmatprep.subr.mxu0 0.0
    %1206 = vmatpush1.msra.mxu0 %v1200
    %1207 = vmatprep.subr.mxu0 0.0
    %1208 = vmatpush1.msra.mxu0 0.0
    %1209 = vmatprep.subr.mxu0 0.0
    %1210 = vmatpush1.msra.mxu0 0.0
    %1211 = vmatprep.subr.mxu0 0.0
    %1212 = vmatpush1.msra.mxu0 0.0
    %1213 = vmatprep.subr.mxu0 0.0
    %1214 = vmatpush1.msra.mxu0 0.0
    %1215 = vmatprep.subr.mxu0 0.0
    %1216 = vmatpush1.msra.mxu0 0.0
    %1217 = vmatprep.subr.mxu0 0.0
    %1218 = vmatpush1.msra.mxu0 0.0
    %1219 = vmatprep.subr.mxu0 0.0
    %1220 = vmatpush1.msra.mxu0 0.0
    %1221 = vmatprep.subr.mxu0 0.0
    %1222 = vmatpush1.msra.mxu0 0.0
    %1223 = vmatprep.subr.mxu0 0.0
    %1224 = vmatpush1.msra.mxu0 0.0
    %1225 = vmatprep.subr.mxu0 0.0
    %1226 = vmatpush1.msra.mxu0 0.0
    %1227 = vmatprep.subr.mxu0 0.0
    %1228 = vmatpush1.msra.mxu0 0.0
    %1229 = vmatprep.subr.mxu0 0.0
    %1230 = vmatpush1.msra.mxu0 0.0
    %1231 = vmatprep.subr.mxu0 0.0
    %1232 = vmatpush1.msra.mxu0 0.0
    %1233 = vmatprep.subr.mxu0 0.0
    %1234 = vmatpush1.msra.mxu0 0.0
    %1235 = vmatprep.subr.mxu0 0.0
    %1236 = vmatpush1.msra.mxu0 0.0
    %1237 = vmatprep.subr.mxu0 0.0
    %1238 = vmatpush1.msra.mxu0 0.0
    %1239 = vmatprep.subr.mxu0 0.0
    %1240 = vmatpush1.msra.mxu0 0.0
    %1241 = vmatprep.subr.mxu0 0.0
    %1242 = vmatpush1.msra.mxu0 0.0
    %1243 = vmatprep.subr.mxu0 0.0
    %1244 = vmatpush1.msra.mxu0 0.0
    %1245 = vmatprep.subr.mxu0 0.0
    %1246 = vmatpush1.msra.mxu0 0.0
    %1247 = vmatprep.subr.mxu0 0.0
    %1248 = vmatpush1.msra.mxu0 0.0
    %1249 = vmatprep.subr.mxu0 0.0
    %1250 = vmatpush1.msra.mxu0 0.0
    %1251 = vmatprep.subr.mxu0 0.0
    %1252 = vmatpush1.msra.mxu0 0.0
    %1253 = vmatprep.subr.mxu0 0.0
    %1254 = vmatpush1.msra.mxu0 0.0
    %1255 = vmatprep.subr.mxu0 0.0
    %1256 = vmatpush1.msra.mxu0 0.0
    %1257 = vmatprep.subr.mxu0 0.0
    %1258 = vmatpush1.msra.mxu0 0.0
    %1259 = vmatprep.subr.mxu0 0.0
    %1260 = vmatpush1.msra.mxu0 0.0
    %1261 = vmatprep.subr.mxu0 0.0
    %1262 = vmatpush1.msra.mxu0 0.0
    %1263 = vmatprep.subr.mxu0 0.0
    %1264 = vmatpush1.msra.mxu0 0.0
    %1265 = vmatprep.subr.mxu0 0.0
    %1266 = vmatpush1.msra.mxu0 0.0
    %1267 = vmatprep.subr.mxu0 0.0
    %1268 = vmatpush1.msra.mxu0 0.0
    %1269 = vmatprep.mubr.f32.mxu0 0.0
    %1270 = vmatmul.mubr.f32.gmra.mrb[0].mxu0 %v1203
    %v1271 = vpop.f32.mrb[0].mxu0
    %v1272 = vadd.f32 0.0, %v1271
    %v1273 = vpop.f32.mrb[0].mxu0
    %1274 = vdwg.mxu0
    %1275 = vrot.lane.b32.xlu0 %v193, 64
    %v1276 = vpop.permute.xlu0 %1275
    %v1279 = vsel %vm200, %v890, 0
    %1281 = vmatprep.subr.mxu0 0.0
    %1282 = vmatpush1.msra.mxu0 %v1276
    %1283 = vmatprep.subr.mxu0 0.0
    %1284 = vmatpush1.msra.mxu0 0.0
    %1285 = vmatprep.subr.mxu0 0.0
    %1286 = vmatpush1.msra.mxu0 0.0
    %1287 = vmatprep.subr.mxu0 0.0
    %1288 = vmatpush1.msra.mxu0 0.0
    %1289 = vmatprep.subr.mxu0 0.0
    %1290 = vmatpush1.msra.mxu0 0.0
    %1291 = vmatprep.subr.mxu0 0.0
    %1292 = vmatpush1.msra.mxu0 0.0
    %1293 = vmatprep.subr.mxu0 0.0
    %1294 = vmatpush1.msra.mxu0 0.0
    %1295 = vmatprep.subr.mxu0 0.0
    %1296 = vmatpush1.msra.mxu0 0.0
    %1297 = vmatprep.subr.mxu0 0.0
    %1298 = vmatpush1.msra.mxu0 0.0
    %1299 = vmatprep.subr.mxu0 0.0
    %1300 = vmatpush1.msra.mxu0 0.0
    %1301 = vmatprep.subr.mxu0 0.0
    %1302 = vmatpush1.msra.mxu0 0.0
    %1303 = vmatprep.subr.mxu0 0.0
    %1304 = vmatpush1.msra.mxu0 0.0
    %1305 = vmatprep.subr.mxu0 0.0
    %1306 = vmatpush1.msra.mxu0 0.0
    %1307 = vmatprep.subr.mxu0 0.0
    %1308 = vmatpush1.msra.mxu0 0.0
    %1309 = vmatprep.subr.mxu0 0.0
    %1310 = vmatpush1.msra.mxu0 0.0
    %1311 = vmatprep.subr.mxu0 0.0
    %1312 = vmatpush1.msra.mxu0 0.0
    %1313 = vmatprep.subr.mxu0 0.0
    %1314 = vmatpush1.msra.mxu0 0.0
    %1315 = vmatprep.subr.mxu0 0.0
    %1316 = vmatpush1.msra.mxu0 0.0
    %1317 = vmatprep.subr.mxu0 0.0
    %1318 = vmatpush1.msra.mxu0 0.0
    %1319 = vmatprep.subr.mxu0 0.0
    %1320 = vmatpush1.msra.mxu0 0.0
    %1321 = vmatprep.subr.mxu0 0.0
    %1322 = vmatpush1.msra.mxu0 0.0
    %1323 = vmatprep.subr.mxu0 0.0
    %1324 = vmatpush1.msra.mxu0 0.0
    %1325 = vmatprep.subr.mxu0 0.0
    %1326 = vmatpush1.msra.mxu0 0.0
    %1327 = vmatprep.subr.mxu0 0.0
    %1328 = vmatpush1.msra.mxu0 0.0
    %1329 = vmatprep.subr.mxu0 0.0
    %1330 = vmatpush1.msra.mxu0 0.0
    %1331 = vmatprep.subr.mxu0 0.0
    %1332 = vmatpush1.msra.mxu0 0.0
    %1333 = vmatprep.subr.mxu0 0.0
    %1334 = vmatpush1.msra.mxu0 0.0
    %1335 = vmatprep.subr.mxu0 0.0
    %1336 = vmatpush1.msra.mxu0 0.0
    %1337 = vmatprep.subr.mxu0 0.0
    %1338 = vmatpush1.msra.mxu0 0.0
    %1339 = vmatprep.subr.mxu0 0.0
    %1340 = vmatpush1.msra.mxu0 0.0
    %1341 = vmatprep.subr.mxu0 0.0
    %1342 = vmatpush1.msra.mxu0 0.0
    %1343 = vmatprep.subr.mxu0 0.0
    %1344 = vmatpush1.msra.mxu0 0.0
    %1345 = vmatprep.mubr.f32.mxu0 0.0
    %1346 = vmatmul.mubr.f32.gmra.mrb[0].mxu0 %v1279
    %v1347 = vpop.f32.mrb[0].mxu0
    %v1348 = vadd.f32 0.0, %v1347
    %v1349 = vpop.f32.mrb[0].mxu0
    %1350 = vdwg.mxu0
    %1351 = vrot.lane.b32.xlu0 %v195, 64
    %v1352 = vpop.permute.xlu0 %1351
    %v1355 = vsel %vm200, %v892, 0
    %1357 = vmatprep.subr.mxu0 0.0
    %1358 = vmatpush1.msra.mxu0 %v1352
    %1359 = vmatprep.subr.mxu0 0.0
    %1360 = vmatpush1.msra.mxu0 0.0
    %1361 = vmatprep.subr.mxu0 0.0
    %1362 = vmatpush1.msra.mxu0 0.0
    %1363 = vmatprep.subr.mxu0 0.0
    %1364 = vmatpush1.msra.mxu0 0.0
    %1365 = vmatprep.subr.mxu0 0.0
    %1366 = vmatpush1.msra.mxu0 0.0
    %1367 = vmatprep.subr.mxu0 0.0
    %1368 = vmatpush1.msra.mxu0 0.0
    %1369 = vmatprep.subr.mxu0 0.0
    %1370 = vmatpush1.msra.mxu0 0.0
    %1371 = vmatprep.subr.mxu0 0.0
    %1372 = vmatpush1.msra.mxu0 0.0
    %1373 = vmatprep.subr.mxu0 0.0
    %1374 = vmatpush1.msra.mxu0 0.0
    %1375 = vmatprep.subr.mxu0 0.0
    %1376 = vmatpush1.msra.mxu0 0.0
    %1377 = vmatprep.subr.mxu0 0.0
    %1378 = vmatpush1.msra.mxu0 0.0
    %1379 = vmatprep.subr.mxu0 0.0
    %1380 = vmatpush1.msra.mxu0 0.0
    %1381 = vmatprep.subr.mxu0 0.0
    %1382 = vmatpush1.msra.mxu0 0.0
    %1383 = vmatprep.subr.mxu0 0.0
    %1384 = vmatpush1.msra.mxu0 0.0
    %1385 = vmatprep.subr.mxu0 0.0
    %1386 = vmatpush1.msra.mxu0 0.0
    %1387 = vmatprep.subr.mxu0 0.0
    %1388 = vmatpush1.msra.mxu0 0.0
    %1389 = vmatprep.subr.mxu0 0.0
    %1390 = vmatpush1.msra.mxu0 0.0
    %1391 = vmatprep.subr.mxu0 0.0
    %1392 = vmatpush1.msra.mxu0 0.0
    %1393 = vmatprep.subr.mxu0 0.0
    %1394 = vmatpush1.msra.mxu0 0.0
    %1395 = vmatprep.subr.mxu0 0.0
    %1396 = vmatpush1.msra.mxu0 0.0
    %1397 = vmatprep.subr.mxu0 0.0
    %1398 = vmatpush1.msra.mxu0 0.0
    %1399 = vmatprep.subr.mxu0 0.0
    %1400 = vmatpush1.msra.mxu0 0.0
    %1401 = vmatprep.subr.mxu0 0.0
    %1402 = vmatpush1.msra.mxu0 0.0
    %1403 = vmatprep.subr.mxu0 0.0
    %1404 = vmatpush1.msra.mxu0 0.0
    %1405 = vmatprep.subr.mxu0 0.0
    %1406 = vmatpush1.msra.mxu0 0.0
    %1407 = vmatprep.subr.mxu0 0.0
    %1408 = vmatpush1.msra.mxu0 0.0
    %1409 = vmatprep.subr.mxu0 0.0
    %1410 = vmatpush1.msra.mxu0 0.0
    %1411 = vmatprep.subr.mxu0 0.0
    %1412 = vmatpush1.msra.mxu0 0.0
    %1413 = vmatprep.subr.mxu0 0.0
    %1414 = vmatpush1.msra.mxu0 0.0
    %1415 = vmatprep.subr.mxu0 0.0
    %1416 = vmatpush1.msra.mxu0 0.0
    %1417 = vmatprep.subr.mxu0 0.0
    %1418 = vmatpush1.msra.mxu0 0.0
    %1419 = vmatprep.subr.mxu0 0.0
    %1420 = vmatpush1.msra.mxu0 0.0
    %1421 = vmatprep.mubr.f32.mxu0 0.0
    %1422 = vmatmul.mubr.f32.gmra.mrb[0].mxu0 %v1355
    %v1423 = vpop.f32.mrb[0].mxu0
    %v1424 = vadd.f32 0.0, %v1423
    %v1425 = vpop.f32.mrb[0].mxu0
    %1426 = vdwg.mxu0
    %1427 = vrot.lane.b32.xlu0 %v197, 64
    %v1428 = vpop.permute.xlu0 %1427
    %v1431 = vsel %vm200, %v894, 0
    %1433 = vmatprep.subr.mxu0 0.0
    %1434 = vmatpush1.msra.mxu0 %v1428
    %1435 = vmatprep.subr.mxu0 0.0
    %1436 = vmatpush1.msra.mxu0 0.0
    %1437 = vmatprep.subr.mxu0 0.0
    %1438 = vmatpush1.msra.mxu0 0.0
    %1439 = vmatprep.subr.mxu0 0.0
    %1440 = vmatpush1.msra.mxu0 0.0
    %1441 = vmatprep.subr.mxu0 0.0
    %1442 = vmatpush1.msra.mxu0 0.0
    %1443 = vmatprep.subr.mxu0 0.0
    %1444 = vmatpush1.msra.mxu0 0.0
    %1445 = vmatprep.subr.mxu0 0.0
    %1446 = vmatpush1.msra.mxu0 0.0
    %1447 = vmatprep.subr.mxu0 0.0
    %1448 = vmatpush1.msra.mxu0 0.0
    %1449 = vmatprep.subr.mxu0 0.0
    %1450 = vmatpush1.msra.mxu0 0.0
    %1451 = vmatprep.subr.mxu0 0.0
    %1452 = vmatpush1.msra.mxu0 0.0
    %1453 = vmatprep.subr.mxu0 0.0
    %1454 = vmatpush1.msra.mxu0 0.0
    %1455 = vmatprep.subr.mxu0 0.0
    %1456 = vmatpush1.msra.mxu0 0.0
    %1457 = vmatprep.subr.mxu0 0.0
    %1458 = vmatpush1.msra.mxu0 0.0
    %1459 = vmatprep.subr.mxu0 0.0
    %1460 = vmatpush1.msra.mxu0 0.0
    %1461 = vmatprep.subr.mxu0 0.0
    %1462 = vmatpush1.msra.mxu0 0.0
    %1463 = vmatprep.subr.mxu0 0.0
    %1464 = vmatpush1.msra.mxu0 0.0
    %1465 = vmatprep.subr.mxu0 0.0
    %1466 = vmatpush1.msra.mxu0 0.0
    %1467 = vmatprep.subr.mxu0 0.0
    %1468 = vmatpush1.msra.mxu0 0.0
    %1469 = vmatprep.subr.mxu0 0.0
    %1470 = vmatpush1.msra.mxu0 0.0
    %1471 = vmatprep.subr.mxu0 0.0
    %1472 = vmatpush1.msra.mxu0 0.0
    %1473 = vmatprep.subr.mxu0 0.0
    %1474 = vmatpush1.msra.mxu0 0.0
    %1475 = vmatprep.subr.mxu0 0.0
    %1476 = vmatpush1.msra.mxu0 0.0
    %1477 = vmatprep.subr.mxu0 0.0
    %1478 = vmatpush1.msra.mxu0 0.0
    %1479 = vmatprep.subr.mxu0 0.0
    %1480 = vmatpush1.msra.mxu0 0.0
    %1481 = vmatprep.subr.mxu0 0.0
    %1482 = vmatpush1.msra.mxu0 0.0
    %1483 = vmatprep.subr.mxu0 0.0
    %1484 = vmatpush1.msra.mxu0 0.0
    %1485 = vmatprep.subr.mxu0 0.0
    %1486 = vmatpush1.msra.mxu0 0.0
    %1487 = vmatprep.subr.mxu0 0.0
    %1488 = vmatpush1.msra.mxu0 0.0
    %1489 = vmatprep.subr.mxu0 0.0
    %1490 = vmatpush1.msra.mxu0 0.0
    %1491 = vmatprep.subr.mxu0 0.0
    %1492 = vmatpush1.msra.mxu0 0.0
    %1493 = vmatprep.subr.mxu0 0.0
    %1494 = vmatpush1.msra.mxu0 0.0
    %1495 = vmatprep.subr.mxu0 0.0
    %1496 = vmatpush1.msra.mxu0 0.0
    %1497 = vmatprep.mubr.f32.mxu0 0.0
    %1498 = vmatmul.mubr.f32.gmra.mrb[0].mxu0 %v1431
    %v1499 = vpop.f32.mrb[0].mxu0
    %v1500 = vadd.f32 0.0, %v1499
    %v1501 = vpop.f32.mrb[0].mxu0
    %1502 = vdwg.mxu0
    %1503 = vst.msk [vmem:[#allocation2] sm:$0xff] %vm200, %v968
    %1504 = vst.msk [vmem:[#allocation2 + $0x8] sm:$0xff] %vm200, %v1044
    %1507 = vrot.lane.b32.xlu0 %v1120, 8
    %v1508 = vpop.permute.xlu0 %1507
    %1509 = vrot.lane.b32.xlu0 %v1196, 8
    %v1510 = vpop.permute.xlu0 %1509
    %vm1513 = vcmask 130112
    %1514 = vst.msk [vmem:[#allocation2] sm:$0xff] %vm1513, %v1508
    %1515 = vst.msk [vmem:[#allocation2 + $0x8] sm:$0xff] %vm1513, %v1510
    %1518 = vrot.lane.b32.xlu0 %v1272, 16
    %v1519 = vpop.permute.xlu0 %1518
    %1520 = vrot.lane.b32.xlu0 %v1348, 16
    %v1521 = vpop.permute.xlu0 %1520
    %vm1524 = vcmask 195712
    %1525 = vst.msk [vmem:[#allocation2] sm:$0xff] %vm1524, %v1519
    %1526 = vst.msk [vmem:[#allocation2 + $0x8] sm:$0xff] %vm1524, %v1521
    %1529 = vrot.lane.b32.xlu0 %v1424, 24
    %v1530 = vpop.permute.xlu0 %1529
    %1531 = vrot.lane.b32.xlu0 %v1500, 24
    %v1532 = vpop.permute.xlu0 %1531
    %vm1535 = vcmask 261312
    %1536 = vst.msk [vmem:[#allocation2] sm:$0xff] %vm1535, %v1530
    %1537 = vst.msk [vmem:[#allocation2 + $0x8] sm:$0xff] %vm1535, %v1532
    %v1538 = vld [vmem:[#allocation2] sm:$0xff]
    %v1539 = vld [vmem:[#allocation2 + $0x8] sm:$0xff]
    %v1540 = vld [vmem:[%s5] sm:$0xff]
    %v1541 = vld [vmem:[%s5 + $0x8] sm:$0xff]
    %v1542 = vld [vmem:[%s5 + $0x10] sm:$0xff]
    %v1543 = vld [vmem:[%s5 + $0x18] sm:$0xff]
    %v1544 = vld [vmem:[%s6] sm:$0x1]
    %v1546 = vlaneseq
    %v1547 = vshrl.u32 %v1546, 7
    %v1548 = vsub.s32 0, %v1547
    %v1549 = vrot.slane %v1544, %v1548
    %v1552 = vsel %vm49, %v1538, 0
    %v1555 = vsel %vm49, %v1539, 0
    %1557 = vmatprep.subr.mxu0 0.0
    %1558 = vmatpush1.msra.mxu0 %v1540
    %1559 = vmatprep.subr.mxu0 0.0
    %1560 = vmatpush1.msra.mxu0 %v1541
    %1561 = vmatprep.subr.mxu0 0.0
    %1562 = vmatpush1.msra.mxu0 %v1542
    %1563 = vmatprep.subr.mxu0 0.0
    %1564 = vmatpush1.msra.mxu0 %v1543
    %1565 = vmatprep.subr.mxu0 0.0
    %1566 = vmatpush1.msra.mxu0 0.0
    %1567 = vmatprep.subr.mxu0 0.0
    %1568 = vmatpush1.msra.mxu0 0.0
    %1569 = vmatprep.subr.mxu0 0.0
    %1570 = vmatpush1.msra.mxu0 0.0
    %1571 = vmatprep.subr.mxu0 0.0
    %1572 = vmatpush1.msra.mxu0 0.0
    %1573 = vmatprep.subr.mxu0 0.0
    %1574 = vmatpush1.msra.mxu0 0.0
    %1575 = vmatprep.subr.mxu0 0.0
    %1576 = vmatpush1.msra.mxu0 0.0
    %1577 = vmatprep.subr.mxu0 0.0
    %1578 = vmatpush1.msra.mxu0 0.0
    %1579 = vmatprep.subr.mxu0 0.0
    %1580 = vmatpush1.msra.mxu0 0.0
    %1581 = vmatprep.subr.mxu0 0.0
    %1582 = vmatpush1.msra.mxu0 0.0
    %1583 = vmatprep.subr.mxu0 0.0
    %1584 = vmatpush1.msra.mxu0 0.0
    %1585 = vmatprep.subr.mxu0 0.0
    %1586 = vmatpush1.msra.mxu0 0.0
    %1587 = vmatprep.subr.mxu0 0.0
    %1588 = vmatpush1.msra.mxu0 0.0
    %1589 = vmatprep.subr.mxu0 0.0
    %1590 = vmatpush1.msra.mxu0 0.0
    %1591 = vmatprep.subr.mxu0 0.0
    %1592 = vmatpush1.msra.mxu0 0.0
    %1593 = vmatprep.subr.mxu0 0.0
    %1594 = vmatpush1.msra.mxu0 0.0
    %1595 = vmatprep.subr.mxu0 0.0
    %1596 = vmatpush1.msra.mxu0 0.0
    %1597 = vmatprep.subr.mxu0 0.0
    %1598 = vmatpush1.msra.mxu0 0.0
    %1599 = vmatprep.subr.mxu0 0.0
    %1600 = vmatpush1.msra.mxu0 0.0
    %1601 = vmatprep.subr.mxu0 0.0
    %1602 = vmatpush1.msra.mxu0 0.0
    %1603 = vmatprep.subr.mxu0 0.0
    %1604 = vmatpush1.msra.mxu0 0.0
    %1605 = vmatprep.subr.mxu0 0.0
    %1606 = vmatpush1.msra.mxu0 0.0
    %1607 = vmatprep.subr.mxu0 0.0
    %1608 = vmatpush1.msra.mxu0 0.0
    %1609 = vmatprep.subr.mxu0 0.0
    %1610 = vmatpush1.msra.mxu0 0.0
    %1611 = vmatprep.subr.mxu0 0.0
    %1612 = vmatpush1.msra.mxu0 0.0
    %1613 = vmatprep.subr.mxu0 0.0
    %1614 = vmatpush1.msra.mxu0 0.0
    %1615 = vmatprep.subr.mxu0 0.0
    %1616 = vmatpush1.msra.mxu0 0.0
    %1617 = vmatprep.subr.mxu0 0.0
    %1618 = vmatpush1.msra.mxu0 0.0
    %1619 = vmatprep.subr.mxu0 0.0
    %1620 = vmatpush1.msra.mxu0 0.0
    %1621 = vmatprep.mubr.f32.mxu0 0.0
    %1622 = vmatmul.mubr.f32.gmra.mrb[0].mxu0 %v1552
    %v1623 = vpop.f32.mrb[0].mxu0
    %v1624 = vadd.f32 %v1549, %v1623
    %v1625 = vpop.f32.mrb[0].mxu0
    %1626 = vmatprep.mubr.f32.mxu0 0.0
    %1627 = vmatmul.mubr.f32.gmra.mrb[0].mxu0 %v1555
    %v1628 = vpop.f32.mrb[0].mxu0
    %v1629 = vadd.f32 %v1549, %v1628
    %v1630 = vpop.f32.mrb[0].mxu0
    %1631 = vdwg.mxu0
    %v1632 = vadd.f32 %v1624, %v45
    %v1633 = vadd.f32 %v1629, %v46
    %v1634 = vld [vmem:[%s7] sm:$0x1]
    %v1635 = vld [vmem:[%s8] sm:$0x1]
    %v1636 = vsel %vm49, %v1632, 0.0
    %1637 = vadd.xlane.f32.xlu0 %v1636
    %v1638 = vpop.xlane.xlu0 %1637
    %v1639 = vsel %vm49, %v1633, 0.0
    %1640 = vadd.xlane.f32.xlu0 %v1639
    %v1641 = vpop.xlane.xlu0 %1640
    %v1642 = vmul.f32 %v1638, 0.03125
    %v1643 = vmul.f32 %v1641, 0.03125
    %v1644 = vsub.f32 %v1632, %v1642
    %v1645 = vsub.f32 %v1633, %v1643
    %v1646 = vmul.f32 %v1644, %v1644
    %v1647 = vmul.f32 %v1645, %v1645
    %v1648 = vsel %vm49, %v1646, 0.0
    %1649 = vadd.xlane.f32.xlu0 %v1648
    %v1650 = vpop.xlane.xlu0 %1649
    %v1651 = vsel %vm49, %v1647, 0.0
    %1652 = vadd.xlane.f32.xlu0 %v1651
    %v1653 = vpop.xlane.xlu0 %1652
    %v1654 = vmul.f32 %v1650, 0.03125
    %v1655 = vmul.f32 %v1653, 0.03125
    %v1656 = vadd.f32 %v1654, 1e-06
    %v1657 = vadd.f32 %v1655, 1e-06
    %v1658 = vrsqrt.pop %v1656
    %v1659 = vrsqrt.pop %v1657
    %v1660 = vmul.f32 %v1644, %v1658
    %v1661 = vmul.f32 %v1645, %v1659
    %v1663 = vlaneseq
    %v1664 = vshrl.u32 %v1663, 7
    %v1665 = vsub.s32 0, %v1664
    %v1666 = vrot.slane %v1634, %v1665
    %v1668 = vmul.f32 %v1660, %v1666
    %v1669 = vmul.f32 %v1661, %v1666
    %v1671 = vlaneseq
    %v1672 = vshrl.u32 %v1671, 7
    %v1673 = vsub.s32 0, %v1672
    %v1674 = vrot.slane %v1635, %v1673
    %v1676 = vadd.f32 %v1668, %v1674
    %v1677 = vadd.f32 %v1669, %v1674
    %v1678 = vld [vmem:[%s9] sm:$0xff]
    %v1679 = vld [vmem:[%s9 + $0x8] sm:$0xff]
    %v1680 = vld [vmem:[%s9 + $0x10] sm:$0xff]
    %v1681 = vld [vmem:[%s9 + $0x18] sm:$0xff]
    %v1682 = vld [vmem:[%s10] sm:$0x1]
    %v1684 = vlaneseq
    %v1685 = vshrl.u32 %v1684, 7
    %v1686 = vsub.s32 0, %v1685
    %v1687 = vrot.slane %v1682, %v1686
    %v1690 = vsel %vm49, %v1676, 0
    %v1693 = vsel %vm49, %v1677, 0
    %1695 = vmatprep.subr.mxu0 0.0
    %1696 = vmatpush1.msra.mxu0 %v1678
    %1697 = vmatprep.subr.mxu0 0.0
    %1698 = vmatpush1.msra.mxu0 %v1679
    %1699 = vmatprep.subr.mxu0 0.0
    %1700 = vmatpush1.msra.mxu0 %v1680
    %1701 = vmatprep.subr.mxu0 0.0
    %1702 = vmatpush1.msra.mxu0 %v1681
    %1703 = vmatprep.subr.mxu0 0.0
    %1704 = vmatpush1.msra.mxu0 0.0
    %1705 = vmatprep.subr.mxu0 0.0
    %1706 = vmatpush1.msra.mxu0 0.0
    %1707 = vmatprep.subr.mxu0 0.0
    %1708 = vmatpush1.msra.mxu0 0.0
    %1709 = vmatprep.subr.mxu0 0.0
    %1710 = vmatpush1.msra.mxu0 0.0
    %1711 = vmatprep.subr.mxu0 0.0
    %1712 = vmatpush1.msra.mxu0 0.0
    %1713 = vmatprep.subr.mxu0 0.0
    %1714 = vmatpush1.msra.mxu0 0.0
    %1715 = vmatprep.subr.mxu0 0.0
    %1716 = vmatpush1.msra.mxu0 0.0
    %1717 = vmatprep.subr.mxu0 0.0
    %1718 = vmatpush1.msra.mxu0 0.0
    %1719 = vmatprep.subr.mxu0 0.0
    %1720 = vmatpush1.msra.mxu0 0.0
    %1721 = vmatprep.subr.mxu0 0.0
    %1722 = vmatpush1.msra.mxu0 0.0
    %1723 = vmatprep.subr.mxu0 0.0
    %1724 = vmatpush1.msra.mxu0 0.0
    %1725 = vmatprep.subr.mxu0 0.0
    %1726 = vmatpush1.msra.mxu0 0.0
    %1727 = vmatprep.subr.mxu0 0.0
    %1728 = vmatpush1.msra.mxu0 0.0
    %1729 = vmatprep.subr.mxu0 0.0
    %1730 = vmatpush1.msra.mxu0 0.0
    %1731 = vmatprep.subr.mxu0 0.0
    %1732 = vmatpush1.msra.mxu0 0.0
    %1733 = vmatprep.subr.mxu0 0.0
    %1734 = vmatpush1.msra.mxu0 0.0
    %1735 = vmatprep.subr.mxu0 0.0
    %1736 = vmatpush1.msra.mxu0 0.0
    %1737 = vmatprep.subr.mxu0 0.0
    %1738 = vmatpush1.msra.mxu0 0.0
    %1739 = vmatprep.subr.mxu0 0.0
    %1740 = vmatpush1.msra.mxu0 0.0
    %1741 = vmatprep.subr.mxu0 0.0
    %1742 = vmatpush1.msra.mxu0 0.0
    %1743 = vmatprep.subr.mxu0 0.0
    %1744 = vmatpush1.msra.mxu0 0.0
    %1745 = vmatprep.subr.mxu0 0.0
    %1746 = vmatpush1.msra.mxu0 0.0
    %1747 = vmatprep.subr.mxu0 0.0
    %1748 = vmatpush1.msra.mxu0 0.0
    %1749 = vmatprep.subr.mxu0 0.0
    %1750 = vmatpush1.msra.mxu0 0.0
    %1751 = vmatprep.subr.mxu0 0.0
    %1752 = vmatpush1.msra.mxu0 0.0
    %1753 = vmatprep.subr.mxu0 0.0
    %1754 = vmatpush1.msra.mxu0 0.0
    %1755 = vmatprep.subr.mxu0 0.0
    %1756 = vmatpush1.msra.mxu0 0.0
    %1757 = vmatprep.subr.mxu0 0.0
    %1758 = vmatpush1.msra.mxu0 0.0
    %1759 = vmatprep.mubr.f32.mxu0 0.0
    %1760 = vmatmul.mubr.f32.gmra.mrb[0].mxu0 %v1690
    %v1761 = vpop.f32.mrb[0].mxu0
    %v1762 = vadd.f32 %v1687, %v1761
    %v1763 = vpop.f32.mrb[0].mxu0
    %1764 = vmatprep.mubr.f32.mxu0 0.0
    %1765 = vmatmul.mubr.f32.gmra.mrb[0].mxu0 %v1693
    %v1766 = vpop.f32.mrb[0].mxu0
    %v1767 = vadd.f32 %v1687, %v1766
    %v1768 = vpop.f32.mrb[0].mxu0
    %1769 = vdwg.mxu0
    %v1770 = vmul.f32 %v1762, 0.5
    %v1771 = vmul.f32 %v1767, 0.5
    %v1772 = vmul.f32 %v1762, 0.70710677
    %v1773 = vmul.f32 %v1767, 0.70710677
    %v1774 = verf.f32.pop %v1772
    %v1775 = verf.f32.pop %v1773
    %v1776 = vadd.f32 %v1774, 1.0
    %v1777 = vadd.f32 %v1775, 1.0
    %v1778 = vmul.f32 %v1770, %v1776
    %v1779 = vmul.f32 %v1771, %v1777
    %v1780 = vld [vmem:[%s11] sm:$0xff]
    %v1781 = vld [vmem:[%s11 + $0x8] sm:$0xff]
    %v1782 = vld [vmem:[%s11 + $0x10] sm:$0xff]
    %v1783 = vld [vmem:[%s11 + $0x18] sm:$0xff]
    %v1784 = vld [vmem:[%s11 + $0x20] sm:$0xff]
    %v1785 = vld [vmem:[%s11 + $0x28] sm:$0xff]
    %v1786 = vld [vmem:[%s11 + $0x30] sm:$0xff]
    %v1787 = vld [vmem:[%s11 + $0x38] sm:$0xff]
    %v1788 = vld [vmem:[%s11 + $0x40] sm:$0xff]
    %v1789 = vld [vmem:[%s11 + $0x48] sm:$0xff]
    %v1790 = vld [vmem:[%s11 + $0x50] sm:$0xff]
    %v1791 = vld [vmem:[%s11 + $0x58] sm:$0xff]
    %v1792 = vld [vmem:[%s11 + $0x60] sm:$0xff]
    %v1793 = vld [vmem:[%s11 + $0x68] sm:$0xff]
    %v1794 = vld [vmem:[%s11 + $0x70] sm:$0xff]
    %v1795 = vld [vmem:[%s11 + $0x78] sm:$0xff]
    %v1796 = vld [vmem:[%s12] sm:$0x1]
    %v1798 = vlaneseq
    %v1799 = vshrl.u32 %v1798, 7
    %v1800 = vsub.s32 0, %v1799
    %v1801 = vrot.slane %v1796, %v1800
    %1803 = vmatprep.subr.mxu0 0.0
    %1804 = vmatpush1.msra.mxu0 %v1780
    %1805 = vmatprep.subr.mxu0 0.0
    %1806 = vmatpush1.msra.mxu0 %v1781
    %1807 = vmatprep.subr.mxu0 0.0
    %1808 = vmatpush1.msra.mxu0 %v1782
    %1809 = vmatprep.subr.mxu0 0.0
    %1810 = vmatpush1.msra.mxu0 %v1783
    %1811 = vmatprep.subr.mxu0 0.0
    %1812 = vmatpush1.msra.mxu0 %v1784
    %1813 = vmatprep.subr.mxu0 0.0
    %1814 = vmatpush1.msra.mxu0 %v1785
    %1815 = vmatprep.subr.mxu0 0.0
    %1816 = vmatpush1.msra.mxu0 %v1786
    %1817 = vmatprep.subr.mxu0 0.0
    %1818 = vmatpush1.msra.mxu0 %v1787
    %1819 = vmatprep.subr.mxu0 0.0
    %1820 = vmatpush1.msra.mxu0 %v1788
    %1821 = vmatprep.subr.mxu0 0.0
    %1822 = vmatpush1.msra.mxu0 %v1789
    %1823 = vmatprep.subr.mxu0 0.0
    %1824 = vmatpush1.msra.mxu0 %v1790
    %1825 = vmatprep.subr.mxu0 0.0
    %1826 = vmatpush1.msra.mxu0 %v1791
    %1827 = vmatprep.subr.mxu0 0.0
    %1828 = vmatpush1.msra.mxu0 %v1792
    %1829 = vmatprep.subr.mxu0 0.0
    %1830 = vmatpush1.msra.mxu0 %v1793
    %1831 = vmatprep.subr.mxu0 0.0
    %1832 = vmatpush1.msra.mxu0 %v1794
    %1833 = vmatprep.subr.mxu0 0.0
    %1834 = vmatpush1.msra.mxu0 %v1795
    %1835 = vmatprep.subr.mxu0 0.0
    %1836 = vmatpush1.msra.mxu0 0.0
    %1837 = vmatprep.subr.mxu0 0.0
    %1838 = vmatpush1.msra.mxu0 0.0
    %1839 = vmatprep.subr.mxu0 0.0
    %1840 = vmatpush1.msra.mxu0 0.0
    %1841 = vmatprep.subr.mxu0 0.0
    %1842 = vmatpush1.msra.mxu0 0.0
    %1843 = vmatprep.subr.mxu0 0.0
    %1844 = vmatpush1.msra.mxu0 0.0
    %1845 = vmatprep.subr.mxu0 0.0
    %1846 = vmatpush1.msra.mxu0 0.0
    %1847 = vmatprep.subr.mxu0 0.0
    %1848 = vmatpush1.msra.mxu0 0.0
    %1849 = vmatprep.subr.mxu0 0.0
    %1850 = vmatpush1.msra.mxu0 0.0
    %1851 = vmatprep.subr.mxu0 0.0
    %1852 = vmatpush1.msra.mxu0 0.0
    %1853 = vmatprep.subr.mxu0 0.0
    %1854 = vmatpush1.msra.mxu0 0.0
    %1855 = vmatprep.subr.mxu0 0.0
    %1856 = vmatpush1.msra.mxu0 0.0
    %1857 = vmatprep.subr.mxu0 0.0
    %1858 = vmatpush1.msra.mxu0 0.0
    %1859 = vmatprep.subr.mxu0 0.0
    %1860 = vmatpush1.msra.mxu0 0.0
    %1861 = vmatprep.subr.mxu0 0.0
    %1862 = vmatpush1.msra.mxu0 0.0
    %1863 = vmatprep.subr.mxu0 0.0
    %1864 = vmatpush1.msra.mxu0 0.0
    %1865 = vmatprep.subr.mxu0 0.0
    %1866 = vmatpush1.msra.mxu0 0.0
    %1867 = vmatprep.mubr.f32.mxu0 0.0
    %1868 = vmatmul.mubr.f32.gmra.mrb[0].mxu0 %v1778
    %v1869 = vpop.f32.mrb[0].mxu0
    %v1870 = vadd.f32 %v1801, %v1869
    %v1871 = vpop.f32.mrb[0].mxu0
    %1872 = vmatprep.mubr.f32.mxu0 0.0
    %1873 = vmatmul.mubr.f32.gmra.mrb[0].mxu0 %v1779
    %v1874 = vpop.f32.mrb[0].mxu0
    %v1875 = vadd.f32 %v1801, %v1874
    %v1876 = vpop.f32.mrb[0].mxu0
    %1877 = vdwg.mxu0
    %v1878 = vadd.f32 %v1870, %v1632
    %v1879 = vadd.f32 %v1875, %v1633
    %1880 = vst.msk [vmem:[#allocation3] sm:$0xff] %vm49, %v1878
    %1881 = vst.msk [vmem:[#allocation3 + $0x8] sm:$0xff] %vm49, %v1879
    // Predicated region
    $region54: #{tpu_custom_call.1} parent=1 // pred_check
      _
    $region55: #{tpu_custom_call.1} parent=1 // pred_check_branch
      %1883 = sbr.rel (0) target = $region57
    $region56: #{tpu_custom_call.1} parent=1 // pred_region
      %s1885 = ssub.s32 256, 256
      %1886 = vsyncadd [#allocation4], %s1885
      %s1887 = sshll.u32 [#allocation3], 4
      %s1888 = int_to_ptr.vmem [resolvable:$true] %s1887
      %1893 = dma.vmem_to_hbm [thread:$0]  %s1888, 256, %s13, [#allocation4], 128, 128, 8
    $region57: #{tpu_custom_call.1} parent=1 // pred_fallthru
      _
    // Predicated region
    $region58: #{tpu_custom_call.1} parent=1 // pred_check
      _
    $region59: #{tpu_custom_call.1} parent=1 // pred_check_branch
      %1895 = sbr.rel (0) target = $region61
    $region60: #{tpu_custom_call.1} parent=1 // pred_region
      %1896 = dma.done [#allocation4], 256
    $region61: #{tpu_custom_call.1} parent=1 // pred_fallthru
      _
    %1897 = vsyncpa [#allocation4], 1

</llo_original>
